<compile_context>
chip_gen: v5e
topology: v5e:2x2
jax: 0.10.0
libtpu: 0.0.40
codegen_flags: <defaults>
</compile_context>

<pallas_src>
import functools
import math

import jax
import jax.numpy as jnp
from jax.experimental import pallas as pl
from jax.experimental.pallas import tpu as pltpu

_LOG_2PI = math.log(2.0 * math.pi)
_OUT_LANES = 128  # lane-dense packed output width (real data in lanes 0..A+1)


def _round_up(x, m):
    return ((x + m - 1) // m) * m


# ----------------------------------------------------------------------------
# Chip detection (safe fallbacks if it cannot be determined).
# ----------------------------------------------------------------------------
def _device_kind():
    try:
        return jax.devices()[0].device_kind.lower()
    except Exception:
        return ""


def _has_small_mxu():
    """True on chips with a 128x128 MXU (v2-v5); False on v6e/v7x (256x256)."""
    kind = _device_kind()
    return any(tag in kind for tag in ("v2", "v3", "v4", "v5"))


def _num_tensorcores_per_chip():
    return 2 if "v7" in _device_kind() else 1


def _choose_batch_tile(batch, *, two_cores, cap=512):
    """Pick (Bp, TB): TB multiple of 8, TB divides Bp (so no big jnp.pad copy),
    large tiles on single-TC chips, grid >= 2 on dual-TC chips."""
    bp = _round_up(batch, 8)

    def best_divisor(limit):
        best = None
        t = 8
        while t <= limit:
            if bp % t == 0:
                best = t
            t += 8
        return best

    limit = min(cap, bp)
    if two_cores:
        tb = best_divisor(min(limit, bp // 2))
        if tb is not None:
            return bp, tb
    tb = best_divisor(limit)
    if tb is not None:
        return bp, tb
    return bp, bp  # bp is a multiple of 8, so this is always valid


# ----------------------------------------------------------------------------
# Kernel bodies. Inputs per batch tile:
#   xin_ref : [TB, D+A] f32   = [state | eps]
#   bias_ref: [4, 2F]   f32   rows: [b1a|b1c], [b2a|b2c], [bm|bco|0], [log_std|0]
#   out_ref : [TB, 128] f32   = [action | log_prob | value | 0...]
# ----------------------------------------------------------------------------
def _finish_and_store(out_ref, mean, value, eps, log_std):
    std = jnp.exp(log_std)
    action = mean + std * eps
    # (action - mean) / std == eps exactly -> simplified Normal log-prob.
    lp = -0.5 * eps * eps - log_std - 0.5 * _LOG_2PI
    log_prob = jnp.sum(lp, axis=-1, keepdims=True)

    pad = out_ref.shape[1] - (action.shape[1] + 2)
    packed = jnp.concatenate(
        [action, log_prob, value,
         jnp.zeros((action.shape[0], pad), jnp.float32)],
        axis=-1,
    )
    out_ref[...] = packed  # single unmasked full-block store


def _fwd_kernel_fused(xin_ref, w1_ref, w2_ref, wh_ref, bias_ref, out_ref,
                      *, obs_dim, act_dim):
    """v6e/v7x path: fused block-diagonal trunk + heads (3 wide matmuls)."""
    D, A = obs_dim, act_dim

    xin = xin_ref[...]
    x = xin[:, :D].astype(jnp.bfloat16)
    eps = xin[:, D:D + A]

    bias = bias_ref[...]
    b1 = bias[0:1, :]
    b2 = bias[1:2, :]
    bh = bias[2:3, :A + 1]
    log_std = bias[3:4, :A]

    h1 = jnp.maximum(
        jnp.dot(x, w1_ref[...], preferred_element_type=jnp.float32) + b1, 0.0)
    h2 = jnp.maximum(
        jnp.dot(h1.astype(jnp.bfloat16), w2_ref[...],
                preferred_element_type=jnp.float32) + b2, 0.0)
    head = jnp.dot(h2.astype(jnp.bfloat16), wh_ref[...],
                   preferred_element_type=jnp.float32) + bh      # [TB, A+1]
    mean = head[:, :A]
    value = head[:, A:A + 1]
    _finish_and_store(out_ref, mean, value, eps, log_std)


def _fwd_kernel_split(xin_ref, w1_ref, w2a_ref, w2c_ref, wm_ref, wco_ref,
                      bias_ref, out_ref, *, obs_dim, act_dim):
    """v5e path: per-branch 128-wide matmuls (no structural-zero MXU passes)."""
    D, A = obs_dim, act_dim
    F = w2a_ref.shape[0]

    xin = xin_ref[...]
    x = xin[:, :D].astype(jnp.bfloat16)
    eps = xin[:, D:D + A]

    bias = bias_ref[...]
    b1 = bias[0:1, :]
    b2 = bias[1:2, :]
    bm = bias[2:3, :A]
    bco = bias[2:3, A:A + 1]
    log_std = bias[3:4, :A]

    # Layer 1 is shared-input (not block-diagonal), keep it fused: [TB, 2F].
    h1 = jnp.maximum(
        jnp.dot(x, w1_ref[...], preferred_element_type=jnp.float32) + b1, 0.0)
    h1a = h1[:, :F].astype(jnp.bfloat16)      # clean 128-lane split
    h1c = h1[:, F:].astype(jnp.bfloat16)

    h2a = jnp.maximum(
        jnp.dot(h1a, w2a_ref[...], preferred_element_type=jnp.float32)
        + b2[:, :F], 0.0)
    h2c = jnp.maximum(
        jnp.dot(h1c, w2c_ref[...], preferred_element_type=jnp.float32)
        + b2[:, F:], 0.0)

    mean = jnp.dot(h2a.astype(jnp.bfloat16), wm_ref[...],
                   preferred_element_type=jnp.float32) + bm       # [TB, A]
    value = jnp.dot(h2c.astype(jnp.bfloat16), wco_ref[...],
                    preferred_element_type=jnp.float32) + bco     # [TB, 1]
    _finish_and_store(out_ref, mean, value, eps, log_std)


# ----------------------------------------------------------------------------
# Wrapper
# ----------------------------------------------------------------------------
def actor_critic_forward(state, packed, eps, *, block_b=512):
    """state: [B, D] f32, eps: [B, A] f32, packed: dict from pack_params()."""
    B, D = state.shape
    A = eps.shape[1]

    two_cores = _num_tensorcores_per_chip() >= 2
    Bp, TB = _choose_batch_tile(B, two_cores=two_cores, cap=block_b)

    # One pipelined input slab: [state | eps].
    xin = jnp.concatenate([state, eps], axis=1)
    if Bp != B:
        xin = jnp.pad(xin, ((0, Bp - B), (0, 0)))  # at most 7 rows

    batch_in = pl.BlockSpec((TB, D + A), lambda i: (i, 0))
    out_spec = pl.BlockSpec((TB, _OUT_LANES), lambda i: (i, 0))

    def resident(shape):
        # Constant index_map -> stays resident in VMEM across grid steps.
        return pl.BlockSpec(shape, lambda i: (0, 0))

    if packed["split"]:
        kernel = functools.partial(_fwd_kernel_split, obs_dim=D, act_dim=A)
        weights = (packed["w1"], packed["w2a"], packed["w2c"],
                   packed["wm"], packed["wco"], packed["bias"])
    else:
        kernel = functools.partial(_fwd_kernel_fused, obs_dim=D, act_dim=A)
        weights = (packed["w1"], packed["w2"], packed["wh"], packed["bias"])

    out = pl.pallas_call(
        kernel,
        out_shape=jax.ShapeDtypeStruct((Bp, _OUT_LANES), jnp.float32),
        grid_spec=pltpu.PrefetchScalarGridSpec(
            num_scalar_prefetch=0,
            grid=(Bp // TB,),
            in_specs=[batch_in] + [resident(w.shape) for w in weights],
            out_specs=out_spec,
        ),
        compiler_params=pltpu.CompilerParams(
            dimension_semantics=("parallel",),   # megacore sharding on v7x
        ),
    )(xin, *weights)

    action = out[:B, :A]
    log_prob = out[:B, A:A + 1]
    value = out[:B, A + 1:A + 2]
    return value, action, log_prob


# ----------------------------------------------------------------------------
# Parameter init (mimics weights_init_): kaiming_uniform(relu) => U(-b, b),
# b = sqrt(6/fan_in); biases = 0; log_std = 0. Weights stored as [in, out].
# ----------------------------------------------------------------------------
def init_params(key, obs_dim, act_dim, fc_units):
    def kaiming_t(key, fan_in, fan_out):
        bound = math.sqrt(6.0 / fan_in)
        return jax.random.uniform(
            key, (fan_in, fan_out), jnp.float32, minval=-bound, maxval=bound)

    ks = jax.random.split(key, 6)
    return {
        "w1a": kaiming_t(ks[0], obs_dim, fc_units),
        "b1a": jnp.zeros((1, fc_units), jnp.float32),
        "w2a": kaiming_t(ks[1], fc_units, fc_units),
        "b2a": jnp.zeros((1, fc_units), jnp.float32),
        "wm": kaiming_t(ks[2], fc_units, act_dim),
        "bm": jnp.zeros((1, act_dim), jnp.float32),
        "log_std": jnp.zeros((1, act_dim), jnp.float32),
        "w1c": kaiming_t(ks[3], obs_dim, fc_units),
        "b1c": jnp.zeros((1, fc_units), jnp.float32),
        "w2c": kaiming_t(ks[4], fc_units, fc_units),
        "b2c": jnp.zeros((1, fc_units), jnp.float32),
        "wco": kaiming_t(ks[5], fc_units, 1),
        "bco": jnp.zeros((1, 1), jnp.float32),
    }


def pack_params(params, *, split_small_mxu=None):
    """Pack weights/biases for the kernel. On 128x128-MXU chips (v5e and
    older) keep layer-2 / head weights per-branch; on v6e/v7x fuse them into
    block-diagonal matrices. Weights cast to bf16, biases stay f32."""
    if split_small_mxu is None:
        split_small_mxu = _has_small_mxu()

    D, F = params["w1a"].shape
    A = params["log_std"].shape[1]
    F2 = 2 * F

    w1 = jnp.concatenate([params["w1a"], params["w1c"]], axis=1)        # [D, 2F]

    bias = jnp.zeros((4, F2), jnp.float32)
    bias = bias.at[0, :].set(
        jnp.concatenate([params["b1a"], params["b1c"]], axis=1)[0])
    bias = bias.at[1, :].set(
        jnp.concatenate([params["b2a"], params["b2c"]], axis=1)[0])
    bias = bias.at[2, :A].set(params["bm"][0])
    bias = bias.at[2, A:A + 1].set(params["bco"][0])
    bias = bias.at[3, :A].set(params["log_std"][0])

    packed = {
        "split": bool(split_small_mxu),
        "w1": w1.astype(jnp.bfloat16),
        "bias": bias,
    }
    if split_small_mxu:
        packed["w2a"] = params["w2a"].astype(jnp.bfloat16)
        packed["w2c"] = params["w2c"].astype(jnp.bfloat16)
        packed["wm"] = params["wm"].astype(jnp.bfloat16)
        packed["wco"] = params["wco"].astype(jnp.bfloat16)
    else:
        w2 = jnp.zeros((F2, F2), jnp.float32)
        w2 = w2.at[:F, :F].set(params["w2a"]).at[F:, F:].set(params["w2c"])
        wh = jnp.zeros((F2, A + 1), jnp.float32)
        wh = wh.at[:F, :A].set(params["wm"]).at[F:, A:].set(params["wco"])
        packed["w2"] = w2.astype(jnp.bfloat16)
        packed["wh"] = wh.astype(jnp.bfloat16)
    return packed


# ----------------------------------------------------------------------------
# Pure-JAX reference (mirrors the bf16 MXU path so tolerances stay tight, but
# uses the original unfused layers and the textbook Normal log-prob formula).
# ----------------------------------------------------------------------------
def reference_forward(state, params, eps):
    def lin(x, w, b):
        return jnp.dot(x.astype(jnp.bfloat16), w.astype(jnp.bfloat16),
                       preferred_element_type=jnp.float32) + b

    relu = lambda v: jnp.maximum(v, 0.0)
    ha = relu(lin(state, params["w1a"], params["b1a"]))
    ha = relu(lin(ha, params["w2a"], params["b2a"]))
    mean = lin(ha, params["wm"], params["bm"])
    log_std = params["log_std"]
    std = jnp.exp(log_std)
    action = mean + std * eps
    lp = (-((action - mean) ** 2) / (2.0 * std * std)
          - log_std - 0.5 * math.log(2.0 * math.pi))
    log_prob = jnp.sum(lp, axis=-1, keepdims=True)
    hc = relu(lin(state, params["w1c"], params["b1c"]))
    hc = relu(lin(hc, params["w2c"], params["b2c"]))
    value = lin(hc, params["wco"], params["bco"])
    return value, action, log_prob


if __name__ == "__main__":
    B, OBS, ACT, FC = 256, 16, 4, 128

    root = jax.random.PRNGKey(0)
    k_param, k_state, k_eps = jax.random.split(root, 3)

    params = init_params(k_param, OBS, ACT, FC)
    packed = pack_params(params)

    state = jax.random.normal(k_state, (B, OBS), jnp.float32)
    # Stochastic path: eps ~ N(0,1) (Normal.sample()).
    eps = jax.random.normal(k_eps, (B, ACT), jnp.float32)

    value, action, log_prob = actor_critic_forward(state, packed, eps)
    jax.block_until_ready((value, action, log_prob))

    v_ref, a_ref, lp_ref = reference_forward(state, params, eps)
    assert jnp.allclose(value, v_ref, atol=5e-3, rtol=5e-3)
    assert jnp.allclose(action, a_ref, atol=5e-3, rtol=5e-3)
    assert jnp.allclose(log_prob, lp_ref, atol=5e-3, rtol=5e-3)

    # Deterministic path (deterministic=True  <=>  eps = 0  =>  action = mean).
    eps0 = jnp.zeros_like(eps)
    v_d, a_d, lp_d = actor_critic_forward(state, packed, eps0)
    jax.block_until_ready((v_d, a_d, lp_d))
    v_rd, a_rd, lp_rd = reference_forward(state, params, eps0)
    assert jnp.allclose(v_d, v_rd, atol=5e-3, rtol=5e-3)
    assert jnp.allclose(a_d, a_rd, atol=5e-3, rtol=5e-3)
    assert jnp.allclose(lp_d, lp_rd, atol=5e-3, rtol=5e-3)

    print("KERNEL_OK")
</pallas_src>

<mosaic_0001>
module attributes {stable_mosaic.version = 11 : i64} {
  func.func @_fwd_kernel_fused(%arg0: i32, %arg1: memref<256x20xf32, #tpu.memory_space<vmem>>, %arg2: memref<16x256xbf16, #tpu.memory_space<vmem>>, %arg3: memref<256x256xbf16, #tpu.memory_space<vmem>>, %arg4: memref<256x5xbf16, #tpu.memory_space<vmem>>, %arg5: memref<4x256xf32, #tpu.memory_space<vmem>>, %arg6: memref<256x128xf32, #tpu.memory_space<vmem>>) attributes {dimension_semantics = [#tpu.dimension_semantics<parallel>], iteration_bounds = array<i64: 1>, scalar_prefetch = 0 : i64, scratch_operands = 0 : i64, tpu.core_type = #tpu.core_type<tc>, window_params = [{transform_indices = @transform_0, window_bounds = array<i64: 256, 20>}, {pipeline_mode = #tpu.pipeline_mode<synchronous>, transform_indices = @transform_1, window_bounds = array<i64: 16, 256>}, {pipeline_mode = #tpu.pipeline_mode<synchronous>, transform_indices = @transform_2, window_bounds = array<i64: 256, 256>}, {pipeline_mode = #tpu.pipeline_mode<synchronous>, transform_indices = @transform_3, window_bounds = array<i64: 256, 5>}, {pipeline_mode = #tpu.pipeline_mode<synchronous>, transform_indices = @transform_4, window_bounds = array<i64: 4, 256>}, {transform_indices = @transform_5, window_bounds = array<i64: 256, 128>}]} {
    %c0 = arith.constant 0 : index
    %c0_0 = arith.constant 0 : index
    %0 = vector.load %arg1[%c0, %c0_0] : memref<256x20xf32, #tpu.memory_space<vmem>>, vector<256x20xf32>
    %1 = vector.extract_strided_slice %0 {offsets = [0, 0], sizes = [256, 16], strides = [1, 1]} : vector<256x20xf32> to vector<256x16xf32>
    %2 = arith.truncf %1 : vector<256x16xf32> to vector<256x16xbf16>
    %3 = vector.extract_strided_slice %0 {offsets = [0, 16], sizes = [256, 4], strides = [1, 1]} : vector<256x20xf32> to vector<256x4xf32>
    %c0_1 = arith.constant 0 : index
    %c0_2 = arith.constant 0 : index
    %4 = vector.load %arg5[%c0_1, %c0_2] : memref<4x256xf32, #tpu.memory_space<vmem>>, vector<4x256xf32>
    %5 = vector.extract_strided_slice %4 {offsets = [0, 0], sizes = [1, 256], strides = [1, 1]} : vector<4x256xf32> to vector<1x256xf32>
    %6 = vector.extract_strided_slice %4 {offsets = [1, 0], sizes = [1, 256], strides = [1, 1]} : vector<4x256xf32> to vector<1x256xf32>
    %7 = vector.extract_strided_slice %4 {offsets = [2, 0], sizes = [1, 5], strides = [1, 1]} : vector<4x256xf32> to vector<1x5xf32>
    %8 = vector.extract_strided_slice %4 {offsets = [3, 0], sizes = [1, 4], strides = [1, 1]} : vector<4x256xf32> to vector<1x4xf32>
    %c0_3 = arith.constant 0 : index
    %c0_4 = arith.constant 0 : index
    %9 = vector.load %arg2[%c0_3, %c0_4] : memref<16x256xbf16, #tpu.memory_space<vmem>>, vector<16x256xbf16>
    %cst = arith.constant dense<0.000000e+00> : vector<256x256xf32>
    %10 = tpu.matmul %2, %9, %cst {dimension_numbers = #tpu.dot_dimension_numbers<[1], [0], [0], [1], [0, 0, 1, 1], [], []>} : vector<256x16xbf16>, vector<16x256xbf16>, vector<256x256xf32> -> vector<256x256xf32>
    %11 = vector.broadcast %5 : vector<1x256xf32> to vector<256x256xf32>
    %12 = arith.addf %10, %11 : vector<256x256xf32>
    %cst_5 = arith.constant 0.000000e+00 : f32
    %13 = vector.broadcast %cst_5 : f32 to vector<256x256xf32>
    %14 = arith.maximumf %12, %13 : vector<256x256xf32>
    %15 = arith.truncf %14 : vector<256x256xf32> to vector<256x256xbf16>
    %c0_6 = arith.constant 0 : index
    %c0_7 = arith.constant 0 : index
    %16 = vector.load %arg3[%c0_6, %c0_7] : memref<256x256xbf16, #tpu.memory_space<vmem>>, vector<256x256xbf16>
    %cst_8 = arith.constant dense<0.000000e+00> : vector<256x256xf32>
    %17 = tpu.matmul %15, %16, %cst_8 {dimension_numbers = #tpu.dot_dimension_numbers<[1], [0], [0], [1], [0, 0, 1, 1], [], []>} : vector<256x256xbf16>, vector<256x256xbf16>, vector<256x256xf32> -> vector<256x256xf32>
    %18 = vector.broadcast %6 : vector<1x256xf32> to vector<256x256xf32>
    %19 = arith.addf %17, %18 : vector<256x256xf32>
    %cst_9 = arith.constant 0.000000e+00 : f32
    %20 = vector.broadcast %cst_9 : f32 to vector<256x256xf32>
    %21 = arith.maximumf %19, %20 : vector<256x256xf32>
    %22 = arith.truncf %21 : vector<256x256xf32> to vector<256x256xbf16>
    %c0_10 = arith.constant 0 : index
    %c0_11 = arith.constant 0 : index
    %23 = vector.load %arg4[%c0_10, %c0_11] : memref<256x5xbf16, #tpu.memory_space<vmem>>, vector<256x5xbf16>
    %cst_12 = arith.constant dense<0.000000e+00> : vector<256x5xf32>
    %24 = tpu.matmul %22, %23, %cst_12 {dimension_numbers = #tpu.dot_dimension_numbers<[1], [0], [0], [1], [0, 0, 1, 1], [], []>} : vector<256x256xbf16>, vector<256x5xbf16>, vector<256x5xf32> -> vector<256x5xf32>
    %25 = vector.broadcast %7 : vector<1x5xf32> to vector<256x5xf32>
    %26 = arith.addf %24, %25 : vector<256x5xf32>
    %27 = vector.extract_strided_slice %26 {offsets = [0, 0], sizes = [256, 4], strides = [1, 1]} : vector<256x5xf32> to vector<256x4xf32>
    %28 = vector.extract_strided_slice %26 {offsets = [0, 4], sizes = [256, 1], strides = [1, 1]} : vector<256x5xf32> to vector<256x1xf32>
    %29 = math.exp %8 : vector<1x4xf32>
    %30 = vector.broadcast %29 : vector<1x4xf32> to vector<256x4xf32>
    %31 = arith.mulf %30, %3 : vector<256x4xf32>
    %32 = arith.addf %27, %31 : vector<256x4xf32>
    %cst_13 = arith.constant -5.000000e-01 : f32
    %33 = vector.broadcast %cst_13 : f32 to vector<256x4xf32>
    %34 = arith.mulf %33, %3 : vector<256x4xf32>
    %35 = arith.mulf %34, %3 : vector<256x4xf32>
    %36 = vector.broadcast %8 : vector<1x4xf32> to vector<256x4xf32>
    %37 = arith.subf %35, %36 : vector<256x4xf32>
    %cst_14 = arith.constant 0.918938517 : f32
    %38 = vector.broadcast %cst_14 : f32 to vector<256x4xf32>
    %39 = arith.subf %37, %38 : vector<256x4xf32>
    %cst_15 = arith.constant dense<0.000000e+00> : vector<256xf32>
    %40 = vector.multi_reduction <add>, %39, %cst_15 [1] : vector<256x4xf32> to vector<256xf32>
    %41 = vector.shape_cast %40 : vector<256xf32> to vector<256x1xf32>
    %cst_16 = arith.constant 0.000000e+00 : f32
    %42 = vector.broadcast %cst_16 : f32 to vector<256x122xf32>
    %43 = tpu.concatenate %32, %41, %28, %42 in 1 : vector<256x4xf32>, vector<256x1xf32>, vector<256x1xf32>, vector<256x122xf32> -> vector<256x128xf32>
    %c0_17 = arith.constant 0 : index
    %c0_18 = arith.constant 0 : index
    %44 = vector.load %arg6[%c0_17, %c0_18] : memref<256x128xf32, #tpu.memory_space<vmem>>, vector<256x128xf32>
    tpu.vector_store %arg6[%c0_17, %c0_18], %43 {strides = array<i32>} : memref<256x128xf32, #tpu.memory_space<vmem>>, vector<256x128xf32>,
    return
  }
  func.func @transform_0(%arg0: i32) -> (i32, i32) {
    %c0_i32 = arith.constant 0 : i32
    %c0_i32_0 = arith.constant 0 : i32
    return %arg0, %c0_i32 : i32, i32
  }
  func.func @transform_1(%arg0: i32) -> (i32, i32) {
    %c0_i32 = arith.constant 0 : i32
    %c0_i32_0 = arith.constant 0 : i32
    %c0_i32_1 = arith.constant 0 : i32
    return %c0_i32, %c0_i32_0 : i32, i32
  }
  func.func @transform_2(%arg0: i32) -> (i32, i32) {
    %c0_i32 = arith.constant 0 : i32
    %c0_i32_0 = arith.constant 0 : i32
    %c0_i32_1 = arith.constant 0 : i32
    return %c0_i32, %c0_i32_0 : i32, i32
  }
  func.func @transform_3(%arg0: i32) -> (i32, i32) {
    %c0_i32 = arith.constant 0 : i32
    %c0_i32_0 = arith.constant 0 : i32
    %c0_i32_1 = arith.constant 0 : i32
    return %c0_i32, %c0_i32_0 : i32, i32
  }
  func.func @transform_4(%arg0: i32) -> (i32, i32) {
    %c0_i32 = arith.constant 0 : i32
    %c0_i32_0 = arith.constant 0 : i32
    %c0_i32_1 = arith.constant 0 : i32
    return %c0_i32, %c0_i32_0 : i32, i32
  }
  func.func @transform_5(%arg0: i32) -> (i32, i32) {
    %c0_i32 = arith.constant 0 : i32
    %c0_i32_0 = arith.constant 0 : i32
    return %arg0, %c0_i32 : i32, i32
  }
}

</mosaic_0001>

<llo_original>
// kernel: tpu_custom_call.1
$region0: #{tpu_custom_call.1}
  #allocation0 [shape = 'u32[]', space=smem, size = 0x4, offset = 0x4, fixed_abs, tag = 'smem constant byte address 0x4 - core index']
  #allocation1 [shape = 'u32[72,128]{1,0:T(1,128)}', space=vmem, size = 0x9000, scoped, tag = 'internal scratch']
  %s0 = inlined_call_operand.vmem [shape: f32[256,20], index: 0, kind: input, shape index: {}]
  %s1 = inlined_call_operand.vmem [shape: bf16[16,256], index: 1, kind: input, shape index: {}]
  %s2 = inlined_call_operand.vmem [shape: bf16[256,256], index: 2, kind: input, shape index: {}]
  %s3 = inlined_call_operand.vmem [shape: bf16[256,5], index: 3, kind: input, shape index: {}]
  %s4 = inlined_call_operand.vmem [shape: f32[4,256], index: 4, kind: input, shape index: {}]
  %s5 = inlined_call_operand.hbm [shape: f32[256,128], index: 5, kind: output, shape index: {}]
  %s6 = sld [smem:[#allocation0]]
  $region30: #{tpu_custom_call.1} parent=0
    _
  %s8 = ssub.s32 1, %s6
  %s9 = scalar_select 0, %s8, %s6
  $region1: #{tpu_custom_call.1} parent=0
    #allocation2 [shape = 'u8[131072]{0}', space=vmem, size = 0x20000, scoped, tag = 'output window, operand 0, single buffered']
    #allocation3 [shape = 's32[1]{0}', space=sflag, size = 0x4, scoped, tag = 'scoped memory for tpu_custom_call.1']
    %10 = vsyncpa [#allocation3], 0
    // Predicated region
    $region2: #{tpu_custom_call.1} parent=1 // pred_check
      _
    $region3: #{tpu_custom_call.1} parent=1 // pred_check_branch
      %12 = sbr.rel (0) target = $region5
    $region4: #{tpu_custom_call.1} parent=1 // pred_region
      _
    $region5: #{tpu_custom_call.1} parent=1 // pred_fallthru
      _
    // Predicated region
    $region6: #{tpu_custom_call.1} parent=1 // pred_check
      _
    $region7: #{tpu_custom_call.1} parent=1 // pred_check_branch
      %14 = sbr.rel (0) target = $region9
    $region8: #{tpu_custom_call.1} parent=1 // pred_region
      _
    $region9: #{tpu_custom_call.1} parent=1 // pred_fallthru
      _
    // Predicated region
    $region10: #{tpu_custom_call.1} parent=1 // pred_check
      _
    $region11: #{tpu_custom_call.1} parent=1 // pred_check_branch
      %16 = sbr.rel (0) target = $region13
    $region12: #{tpu_custom_call.1} parent=1 // pred_region
      _
    $region13: #{tpu_custom_call.1} parent=1 // pred_fallthru
      _
    // Predicated region
    $region14: #{tpu_custom_call.1} parent=1 // pred_check
      _
    $region15: #{tpu_custom_call.1} parent=1 // pred_check_branch
      %18 = sbr.rel (0) target = $region17
    $region16: #{tpu_custom_call.1} parent=1 // pred_region
      _
    $region17: #{tpu_custom_call.1} parent=1 // pred_fallthru
      _
    // Predicated region
    $region18: #{tpu_custom_call.1} parent=1 // pred_check
      _
    $region19: #{tpu_custom_call.1} parent=1 // pred_check_branch
      %20 = sbr.rel (0) target = $region21
    $region20: #{tpu_custom_call.1} parent=1 // pred_region
      _
    $region21: #{tpu_custom_call.1} parent=1 // pred_fallthru
      _
    %v22 = vld [vmem:[%s0] sm:$0xff]
    %v23 = vld [vmem:[%s0 + $0x8] sm:$0xff]
    %v24 = vld [vmem:[%s0 + $0x10] sm:$0xff]
    %v25 = vld [vmem:[%s0 + $0x18] sm:$0xff]
    %v26 = vld [vmem:[%s0 + $0x20] sm:$0xff]
    %v27 = vld [vmem:[%s0 + $0x28] sm:$0xff]
    %v28 = vld [vmem:[%s0 + $0x30] sm:$0xff]
    %v29 = vld [vmem:[%s0 + $0x38] sm:$0xff]
    %v30 = vld [vmem:[%s0 + $0x40] sm:$0xff]
    %v31 = vld [vmem:[%s0 + $0x48] sm:$0xff]
    %v32 = vld [vmem:[%s0 + $0x50] sm:$0xff]
    %v33 = vld [vmem:[%s0 + $0x58] sm:$0xff]
    %v34 = vld [vmem:[%s0 + $0x60] sm:$0xff]
    %v35 = vld [vmem:[%s0 + $0x68] sm:$0xff]
    %v36 = vld [vmem:[%s0 + $0x70] sm:$0xff]
    %v37 = vld [vmem:[%s0 + $0x78] sm:$0xff]
    %v38 = vld [vmem:[%s0 + $0x80] sm:$0xff]
    %v39 = vld [vmem:[%s0 + $0x88] sm:$0xff]
    %v40 = vld [vmem:[%s0 + $0x90] sm:$0xff]
    %v41 = vld [vmem:[%s0 + $0x98] sm:$0xff]
    %v42 = vld [vmem:[%s0 + $0xa0] sm:$0xff]
    %v43 = vld [vmem:[%s0 + $0xa8] sm:$0xff]
    %v44 = vld [vmem:[%s0 + $0xb0] sm:$0xff]
    %v45 = vld [vmem:[%s0 + $0xb8] sm:$0xff]
    %v46 = vld [vmem:[%s0 + $0xc0] sm:$0xff]
    %v47 = vld [vmem:[%s0 + $0xc8] sm:$0xff]
    %v48 = vld [vmem:[%s0 + $0xd0] sm:$0xff]
    %v49 = vld [vmem:[%s0 + $0xd8] sm:$0xff]
    %v50 = vld [vmem:[%s0 + $0xe0] sm:$0xff]
    %v51 = vld [vmem:[%s0 + $0xe8] sm:$0xff]
    %v52 = vld [vmem:[%s0 + $0xf0] sm:$0xff]
    %v53 = vld [vmem:[%s0 + $0xf8] sm:$0xff]
    %v54 = vpack.c.bf16 %v23, %v22
    %v55 = vpack.c.bf16 %v25, %v24
    %v56 = vpack.c.bf16 %v27, %v26
    %v57 = vpack.c.bf16 %v29, %v28
    %v58 = vpack.c.bf16 %v31, %v30
    %v59 = vpack.c.bf16 %v33, %v32
    %v60 = vpack.c.bf16 %v35, %v34
    %v61 = vpack.c.bf16 %v37, %v36
    %v62 = vpack.c.bf16 %v39, %v38
    %v63 = vpack.c.bf16 %v41, %v40
    %v64 = vpack.c.bf16 %v43, %v42
    %v65 = vpack.c.bf16 %v45, %v44
    %v66 = vpack.c.bf16 %v47, %v46
    %v67 = vpack.c.bf16 %v49, %v48
    %v68 = vpack.c.bf16 %v51, %v50
    %v69 = vpack.c.bf16 %v53, %v52
    %v70 = vld [vmem:[%s4] sm:$0xff]
    %v71 = vld [vmem:[%s1] sm:$0xff]
    %v72 = vld [vmem:[%s1 + $0x8] sm:$0xff]
    %v74 = vperm.slane %v70, 0
    %v75 = vperm.slane %v70, 4
    %v78 = vperm.slane %v74, 0
    %v79 = vperm.slane %v75, 0
    %v82 = vunpack.c.l.b16 %v71
    %v83 = vunpack.c.h.b16 %v71
    %v84 = vunpack.c.l.b16 %v72
    %v85 = vunpack.c.h.b16 %v72
    %v86 = vpack.c.b16 %v84, %v82
    %v87 = vpack.c.b16 %v85, %v83
    %vm90 = vcmask 130048
    %v92 = vsel %vm90, %v54, 0
    %v95 = vsel %vm90, %v55, 0
    %v98 = vsel %vm90, %v56, 0
    %v101 = vsel %vm90, %v57, 0
    %v104 = vsel %vm90, %v58, 0
    %v107 = vsel %vm90, %v59, 0
    %v110 = vsel %vm90, %v60, 0
    %v113 = vsel %vm90, %v61, 0
    %v116 = vsel %vm90, %v62, 0
    %v119 = vsel %vm90, %v63, 0
    %v122 = vsel %vm90, %v64, 0
    %v125 = vsel %vm90, %v65, 0
    %v128 = vsel %vm90, %v66, 0
    %v131 = vsel %vm90, %v67, 0
    %v134 = vsel %vm90, %v68, 0
    %v137 = vsel %vm90, %v69, 0
    %139 = vmatpush.bf16.msra.mxu0 0
    %140 = vmatpush.bf16.msra.mxu0 0
    %141 = vmatpush.bf16.msra.mxu0 0
    %142 = vmatpush.bf16.msra.mxu0 0
    %143 = vmatpush.bf16.msra.mxu0 0
    %144 = vmatpush.bf16.msra.mxu0 0
    %145 = vmatpush.bf16.msra.mxu0 0
    %146 = vmatpush.bf16.msra.mxu0 %v86
    %147 = vmatmul.bf16.gmra.mxu0 %v92
    %v148 = vpop.f32.mrf.mxu0
    %v149 = vadd.f32 %v78, %v148
    %v150 = vpop.f32.mrf.mxu0
    %v151 = vadd.f32 %v78, %v150
    %152 = vmatmul.bf16.gmra.mxu0 %v95
    %v153 = vpop.f32.mrf.mxu0
    %v154 = vadd.f32 %v78, %v153
    %v155 = vpop.f32.mrf.mxu0
    %v156 = vadd.f32 %v78, %v155
    %157 = vmatmul.bf16.gmra.mxu0 %v98
    %v158 = vpop.f32.mrf.mxu0
    %v159 = vadd.f32 %v78, %v158
    %v160 = vpop.f32.mrf.mxu0
    %v161 = vadd.f32 %v78, %v160
    %162 = vmatmul.bf16.gmra.mxu0 %v101
    %v163 = vpop.f32.mrf.mxu0
    %v164 = vadd.f32 %v78, %v163
    %v165 = vpop.f32.mrf.mxu0
    %v166 = vadd.f32 %v78, %v165
    %167 = vmatmul.bf16.gmra.mxu0 %v104
    %v168 = vpop.f32.mrf.mxu0
    %v169 = vadd.f32 %v78, %v168
    %v170 = vpop.f32.mrf.mxu0
    %v171 = vadd.f32 %v78, %v170
    %172 = vmatmul.bf16.gmra.mxu0 %v107
    %v173 = vpop.f32.mrf.mxu0
    %v174 = vadd.f32 %v78, %v173
    %v175 = vpop.f32.mrf.mxu0
    %v176 = vadd.f32 %v78, %v175
    %177 = vmatmul.bf16.gmra.mxu0 %v110
    %v178 = vpop.f32.mrf.mxu0
    %v179 = vadd.f32 %v78, %v178
    %v180 = vpop.f32.mrf.mxu0
    %v181 = vadd.f32 %v78, %v180
    %182 = vmatmul.bf16.gmra.mxu0 %v113
    %v183 = vpop.f32.mrf.mxu0
    %v184 = vadd.f32 %v78, %v183
    %v185 = vpop.f32.mrf.mxu0
    %v186 = vadd.f32 %v78, %v185
    %187 = vmatmul.bf16.gmra.mxu0 %v116
    %v188 = vpop.f32.mrf.mxu0
    %v189 = vadd.f32 %v78, %v188
    %v190 = vpop.f32.mrf.mxu0
    %v191 = vadd.f32 %v78, %v190
    %192 = vmatmul.bf16.gmra.mxu0 %v119
    %v193 = vpop.f32.mrf.mxu0
    %v194 = vadd.f32 %v78, %v193
    %v195 = vpop.f32.mrf.mxu0
    %v196 = vadd.f32 %v78, %v195
    %197 = vmatmul.bf16.gmra.mxu0 %v122
    %v198 = vpop.f32.mrf.mxu0
    %v199 = vadd.f32 %v78, %v198
    %v200 = vpop.f32.mrf.mxu0
    %v201 = vadd.f32 %v78, %v200
    %202 = vmatmul.bf16.gmra.mxu0 %v125
    %v203 = vpop.f32.mrf.mxu0
    %v204 = vadd.f32 %v78, %v203
    %v205 = vpop.f32.mrf.mxu0
    %v206 = vadd.f32 %v78, %v205
    %207 = vmatmul.bf16.gmra.mxu0 %v128
    %v208 = vpop.f32.mrf.mxu0
    %v209 = vadd.f32 %v78, %v208
    %v210 = vpop.f32.mrf.mxu0
    %v211 = vadd.f32 %v78, %v210
    %212 = vmatmul.bf16.gmra.mxu0 %v131
    %v213 = vpop.f32.mrf.mxu0
    %v214 = vadd.f32 %v78, %v213
    %v215 = vpop.f32.mrf.mxu0
    %v216 = vadd.f32 %v78, %v215
    %217 = vmatmul.bf16.gmra.mxu0 %v134
    %v218 = vpop.f32.mrf.mxu0
    %v219 = vadd.f32 %v78, %v218
    %v220 = vpop.f32.mrf.mxu0
    %v221 = vadd.f32 %v78, %v220
    %222 = vmatmul.bf16.gmra.mxu0 %v137
    %v223 = vpop.f32.mrf.mxu0
    %v224 = vadd.f32 %v78, %v223
    %v225 = vpop.f32.mrf.mxu0
    %v226 = vadd.f32 %v78, %v225
    %227 = vdwg.mxu0
    %228 = vmatpush.bf16.msra.mxu0 0
    %229 = vmatpush.bf16.msra.mxu0 0
    %230 = vmatpush.bf16.msra.mxu0 0
    %231 = vmatpush.bf16.msra.mxu0 0
    %232 = vmatpush.bf16.msra.mxu0 0
    %233 = vmatpush.bf16.msra.mxu0 0
    %234 = vmatpush.bf16.msra.mxu0 0
    %235 = vmatpush.bf16.msra.mxu0 %v87
    %236 = vmatmul.bf16.gmra.mxu0 %v92
    %v237 = vpop.f32.mrf.mxu0
    %v238 = vadd.f32 %v79, %v237
    %v239 = vpop.f32.mrf.mxu0
    %v240 = vadd.f32 %v79, %v239
    %241 = vmatmul.bf16.gmra.mxu0 %v95
    %v242 = vpop.f32.mrf.mxu0
    %v243 = vadd.f32 %v79, %v242
    %v244 = vpop.f32.mrf.mxu0
    %v245 = vadd.f32 %v79, %v244
    %246 = vmatmul.bf16.gmra.mxu0 %v98
    %v247 = vpop.f32.mrf.mxu0
    %v248 = vadd.f32 %v79, %v247
    %v249 = vpop.f32.mrf.mxu0
    %v250 = vadd.f32 %v79, %v249
    %251 = vmatmul.bf16.gmra.mxu0 %v101
    %v252 = vpop.f32.mrf.mxu0
    %v253 = vadd.f32 %v79, %v252
    %v254 = vpop.f32.mrf.mxu0
    %v255 = vadd.f32 %v79, %v254
    %256 = vmatmul.bf16.gmra.mxu0 %v104
    %v257 = vpop.f32.mrf.mxu0
    %v258 = vadd.f32 %v79, %v257
    %v259 = vpop.f32.mrf.mxu0
    %v260 = vadd.f32 %v79, %v259
    %261 = vmatmul.bf16.gmra.mxu0 %v107
    %v262 = vpop.f32.mrf.mxu0
    %v263 = vadd.f32 %v79, %v262
    %v264 = vpop.f32.mrf.mxu0
    %v265 = vadd.f32 %v79, %v264
    %266 = vmatmul.bf16.gmra.mxu0 %v110
    %v267 = vpop.f32.mrf.mxu0
    %v268 = vadd.f32 %v79, %v267
    %v269 = vpop.f32.mrf.mxu0
    %v270 = vadd.f32 %v79, %v269
    %271 = vmatmul.bf16.gmra.mxu0 %v113
    %v272 = vpop.f32.mrf.mxu0
    %v273 = vadd.f32 %v79, %v272
    %v274 = vpop.f32.mrf.mxu0
    %v275 = vadd.f32 %v79, %v274
    %276 = vmatmul.bf16.gmra.mxu0 %v116
    %v277 = vpop.f32.mrf.mxu0
    %v278 = vadd.f32 %v79, %v277
    %v279 = vpop.f32.mrf.mxu0
    %v280 = vadd.f32 %v79, %v279
    %281 = vmatmul.bf16.gmra.mxu0 %v119
    %v282 = vpop.f32.mrf.mxu0
    %v283 = vadd.f32 %v79, %v282
    %v284 = vpop.f32.mrf.mxu0
    %v285 = vadd.f32 %v79, %v284
    %286 = vmatmul.bf16.gmra.mxu0 %v122
    %v287 = vpop.f32.mrf.mxu0
    %v288 = vadd.f32 %v79, %v287
    %v289 = vpop.f32.mrf.mxu0
    %v290 = vadd.f32 %v79, %v289
    %291 = vmatmul.bf16.gmra.mxu0 %v125
    %v292 = vpop.f32.mrf.mxu0
    %v293 = vadd.f32 %v79, %v292
    %v294 = vpop.f32.mrf.mxu0
    %v295 = vadd.f32 %v79, %v294
    %296 = vmatmul.bf16.gmra.mxu0 %v128
    %v297 = vpop.f32.mrf.mxu0
    %v298 = vadd.f32 %v79, %v297
    %v299 = vpop.f32.mrf.mxu0
    %v300 = vadd.f32 %v79, %v299
    %301 = vmatmul.bf16.gmra.mxu0 %v131
    %v302 = vpop.f32.mrf.mxu0
    %v303 = vadd.f32 %v79, %v302
    %v304 = vpop.f32.mrf.mxu0
    %v305 = vadd.f32 %v79, %v304
    %306 = vmatmul.bf16.gmra.mxu0 %v134
    %v307 = vpop.f32.mrf.mxu0
    %v308 = vadd.f32 %v79, %v307
    %v309 = vpop.f32.mrf.mxu0
    %v310 = vadd.f32 %v79, %v309
    %311 = vmatmul.bf16.gmra.mxu0 %v137
    %v312 = vpop.f32.mrf.mxu0
    %v313 = vadd.f32 %v79, %v312
    %v314 = vpop.f32.mrf.mxu0
    %v315 = vadd.f32 %v79, %v314
    %316 = vdwg.mxu0
    %v317 = vmax.f32 %v149, 0.0
    %v318 = vmax.f32 %v238, 0.0
    %v319 = vmax.f32 %v151, 0.0
    %v320 = vmax.f32 %v240, 0.0
    %v321 = vmax.f32 %v154, 0.0
    %v322 = vmax.f32 %v243, 0.0
    %v323 = vmax.f32 %v156, 0.0
    %v324 = vmax.f32 %v245, 0.0
    %v325 = vmax.f32 %v159, 0.0
    %v326 = vmax.f32 %v248, 0.0
    %v327 = vmax.f32 %v161, 0.0
    %v328 = vmax.f32 %v250, 0.0
    %v329 = vmax.f32 %v164, 0.0
    %v330 = vmax.f32 %v253, 0.0
    %v331 = vmax.f32 %v166, 0.0
    %v332 = vmax.f32 %v255, 0.0
    %v333 = vmax.f32 %v169, 0.0
    %v334 = vmax.f32 %v258, 0.0
    %v335 = vmax.f32 %v171, 0.0
    %v336 = vmax.f32 %v260, 0.0
    %v337 = vmax.f32 %v174, 0.0
    %v338 = vmax.f32 %v263, 0.0
    %v339 = vmax.f32 %v176, 0.0
    %v340 = vmax.f32 %v265, 0.0
    %v341 = vmax.f32 %v179, 0.0
    %v342 = vmax.f32 %v268, 0.0
    %v343 = vmax.f32 %v181, 0.0
    %v344 = vmax.f32 %v270, 0.0
    %v345 = vmax.f32 %v184, 0.0
    %v346 = vmax.f32 %v273, 0.0
    %v347 = vmax.f32 %v186, 0.0
    %v348 = vmax.f32 %v275, 0.0
    %v349 = vmax.f32 %v189, 0.0
    %v350 = vmax.f32 %v278, 0.0
    %v351 = vmax.f32 %v191, 0.0
    %v352 = vmax.f32 %v280, 0.0
    %v353 = vmax.f32 %v194, 0.0
    %v354 = vmax.f32 %v283, 0.0
    %v355 = vmax.f32 %v196, 0.0
    %v356 = vmax.f32 %v285, 0.0
    %v357 = vmax.f32 %v199, 0.0
    %v358 = vmax.f32 %v288, 0.0
    %v359 = vmax.f32 %v201, 0.0
    %v360 = vmax.f32 %v290, 0.0
    %v361 = vmax.f32 %v204, 0.0
    %v362 = vmax.f32 %v293, 0.0
    %v363 = vmax.f32 %v206, 0.0
    %v364 = vmax.f32 %v295, 0.0
    %v365 = vmax.f32 %v209, 0.0
    %v366 = vmax.f32 %v298, 0.0
    %v367 = vmax.f32 %v211, 0.0
    %v368 = vmax.f32 %v300, 0.0
    %v369 = vmax.f32 %v214, 0.0
    %v370 = vmax.f32 %v303, 0.0
    %v371 = vmax.f32 %v216, 0.0
    %v372 = vmax.f32 %v305, 0.0
    %v373 = vmax.f32 %v219, 0.0
    %v374 = vmax.f32 %v308, 0.0
    %v375 = vmax.f32 %v221, 0.0
    %v376 = vmax.f32 %v310, 0.0
    %v377 = vmax.f32 %v224, 0.0
    %v378 = vmax.f32 %v313, 0.0
    %v379 = vmax.f32 %v226, 0.0
    %v380 = vmax.f32 %v315, 0.0
    %v381 = vpack.c.bf16 %v319, %v317
    %v382 = vpack.c.bf16 %v320, %v318
    %v383 = vpack.c.bf16 %v323, %v321
    %v384 = vpack.c.bf16 %v324, %v322
    %v385 = vpack.c.bf16 %v327, %v325
    %v386 = vpack.c.bf16 %v328, %v326
    %v387 = vpack.c.bf16 %v331, %v329
    %v388 = vpack.c.bf16 %v332, %v330
    %v389 = vpack.c.bf16 %v335, %v333
    %v390 = vpack.c.bf16 %v336, %v334
    %v391 = vpack.c.bf16 %v339, %v337
    %v392 = vpack.c.bf16 %v340, %v338
    %v393 = vpack.c.bf16 %v343, %v341
    %v394 = vpack.c.bf16 %v344, %v342
    %v395 = vpack.c.bf16 %v347, %v345
    %v396 = vpack.c.bf16 %v348, %v346
    %v397 = vpack.c.bf16 %v351, %v349
    %v398 = vpack.c.bf16 %v352, %v350
    %v399 = vpack.c.bf16 %v355, %v353
    %v400 = vpack.c.bf16 %v356, %v354
    %v401 = vpack.c.bf16 %v359, %v357
    %v402 = vpack.c.bf16 %v360, %v358
    %v403 = vpack.c.bf16 %v363, %v361
    %v404 = vpack.c.bf16 %v364, %v362
    %v405 = vpack.c.bf16 %v367, %v365
    %v406 = vpack.c.bf16 %v368, %v366
    %v407 = vpack.c.bf16 %v371, %v369
    %v408 = vpack.c.bf16 %v372, %v370
    %v409 = vpack.c.bf16 %v375, %v373
    %v410 = vpack.c.bf16 %v376, %v374
    %v411 = vpack.c.bf16 %v379, %v377
    %v412 = vpack.c.bf16 %v380, %v378
    %v413 = vld [vmem:[%s2] sm:$0xff]
    %v414 = vld [vmem:[%s2 + $0x8] sm:$0xff]
    %v415 = vld [vmem:[%s2 + $0x10] sm:$0xff]
    %v416 = vld [vmem:[%s2 + $0x18] sm:$0xff]
    %v417 = vld [vmem:[%s2 + $0x20] sm:$0xff]
    %v418 = vld [vmem:[%s2 + $0x28] sm:$0xff]
    %v419 = vld [vmem:[%s2 + $0x30] sm:$0xff]
    %v420 = vld [vmem:[%s2 + $0x38] sm:$0xff]
    %v421 = vld [vmem:[%s2 + $0x40] sm:$0xff]
    %v422 = vld [vmem:[%s2 + $0x48] sm:$0xff]
    %v423 = vld [vmem:[%s2 + $0x50] sm:$0xff]
    %v424 = vld [vmem:[%s2 + $0x58] sm:$0xff]
    %v425 = vld [vmem:[%s2 + $0x60] sm:$0xff]
    %v426 = vld [vmem:[%s2 + $0x68] sm:$0xff]
    %v427 = vld [vmem:[%s2 + $0x70] sm:$0xff]
    %v428 = vld [vmem:[%s2 + $0x78] sm:$0xff]
    %v429 = vld [vmem:[%s2 + $0x80] sm:$0xff]
    %v430 = vld [vmem:[%s2 + $0x88] sm:$0xff]
    %v431 = vld [vmem:[%s2 + $0x90] sm:$0xff]
    %v432 = vld [vmem:[%s2 + $0x98] sm:$0xff]
    %v433 = vld [vmem:[%s2 + $0xa0] sm:$0xff]
    %v434 = vld [vmem:[%s2 + $0xa8] sm:$0xff]
    %v435 = vld [vmem:[%s2 + $0xb0] sm:$0xff]
    %v436 = vld [vmem:[%s2 + $0xb8] sm:$0xff]
    %v437 = vld [vmem:[%s2 + $0xc0] sm:$0xff]
    %v438 = vld [vmem:[%s2 + $0xc8] sm:$0xff]
    %v439 = vld [vmem:[%s2 + $0xd0] sm:$0xff]
    %v440 = vld [vmem:[%s2 + $0xd8] sm:$0xff]
    %v441 = vld [vmem:[%s2 + $0xe0] sm:$0xff]
    %v442 = vld [vmem:[%s2 + $0xe8] sm:$0xff]
    %v443 = vld [vmem:[%s2 + $0xf0] sm:$0xff]
    %v444 = vld [vmem:[%s2 + $0xf8] sm:$0xff]
    %v445 = vperm.slane %v70, 1
    %v446 = vperm.slane %v70, 5
    %v449 = vperm.slane %v445, 1
    %v450 = vperm.slane %v446, 1
    %v483 = vunpack.c.l.b16 %v413
    %v484 = vunpack.c.h.b16 %v413
    %v485 = vunpack.c.l.b16 %v414
    %v486 = vunpack.c.h.b16 %v414
    %v487 = vunpack.c.l.b16 %v415
    %v488 = vunpack.c.h.b16 %v415
    %v489 = vunpack.c.l.b16 %v416
    %v490 = vunpack.c.h.b16 %v416
    %v491 = vunpack.c.l.b16 %v417
    %v492 = vunpack.c.h.b16 %v417
    %v493 = vunpack.c.l.b16 %v418
    %v494 = vunpack.c.h.b16 %v418
    %v495 = vunpack.c.l.b16 %v419
    %v496 = vunpack.c.h.b16 %v419
    %v497 = vunpack.c.l.b16 %v420
    %v498 = vunpack.c.h.b16 %v420
    %v499 = vunpack.c.l.b16 %v421
    %v500 = vunpack.c.h.b16 %v421
    %v501 = vunpack.c.l.b16 %v422
    %v502 = vunpack.c.h.b16 %v422
    %v503 = vunpack.c.l.b16 %v423
    %v504 = vunpack.c.h.b16 %v423
    %v505 = vunpack.c.l.b16 %v424
    %v506 = vunpack.c.h.b16 %v424
    %v507 = vunpack.c.l.b16 %v425
    %v508 = vunpack.c.h.b16 %v425
    %v509 = vunpack.c.l.b16 %v426
    %v510 = vunpack.c.h.b16 %v426
    %v511 = vunpack.c.l.b16 %v427
    %v512 = vunpack.c.h.b16 %v427
    %v513 = vunpack.c.l.b16 %v428
    %v514 = vunpack.c.h.b16 %v428
    %v515 = vunpack.c.l.b16 %v429
    %v516 = vunpack.c.h.b16 %v429
    %v517 = vunpack.c.l.b16 %v430
    %v518 = vunpack.c.h.b16 %v430
    %v519 = vunpack.c.l.b16 %v431
    %v520 = vunpack.c.h.b16 %v431
    %v521 = vunpack.c.l.b16 %v432
    %v522 = vunpack.c.h.b16 %v432
    %v523 = vunpack.c.l.b16 %v433
    %v524 = vunpack.c.h.b16 %v433
    %v525 = vunpack.c.l.b16 %v434
    %v526 = vunpack.c.h.b16 %v434
    %v527 = vunpack.c.l.b16 %v435
    %v528 = vunpack.c.h.b16 %v435
    %v529 = vunpack.c.l.b16 %v436
    %v530 = vunpack.c.h.b16 %v436
    %v531 = vunpack.c.l.b16 %v437
    %v532 = vunpack.c.h.b16 %v437
    %v533 = vunpack.c.l.b16 %v438
    %v534 = vunpack.c.h.b16 %v438
    %v535 = vunpack.c.l.b16 %v439
    %v536 = vunpack.c.h.b16 %v439
    %v537 = vunpack.c.l.b16 %v440
    %v538 = vunpack.c.h.b16 %v440
    %v539 = vunpack.c.l.b16 %v441
    %v540 = vunpack.c.h.b16 %v441
    %v541 = vunpack.c.l.b16 %v442
    %v542 = vunpack.c.h.b16 %v442
    %v543 = vunpack.c.l.b16 %v443
    %v544 = vunpack.c.h.b16 %v443
    %v545 = vunpack.c.l.b16 %v444
    %v546 = vunpack.c.h.b16 %v444
    %v547 = vpack.c.b16 %v485, %v483
    %v548 = vpack.c.b16 %v486, %v484
    %v549 = vpack.c.b16 %v489, %v487
    %v550 = vpack.c.b16 %v490, %v488
    %v551 = vpack.c.b16 %v493, %v491
    %v552 = vpack.c.b16 %v494, %v492
    %v553 = vpack.c.b16 %v497, %v495
    %v554 = vpack.c.b16 %v498, %v496
    %v555 = vpack.c.b16 %v501, %v499
    %v556 = vpack.c.b16 %v502, %v500
    %v557 = vpack.c.b16 %v505, %v503
    %v558 = vpack.c.b16 %v506, %v504
    %v559 = vpack.c.b16 %v509, %v507
    %v560 = vpack.c.b16 %v510, %v508
    %v561 = vpack.c.b16 %v513, %v511
    %v562 = vpack.c.b16 %v514, %v512
    %v563 = vpack.c.b16 %v517, %v515
    %v564 = vpack.c.b16 %v518, %v516
    %v565 = vpack.c.b16 %v521, %v519
    %v566 = vpack.c.b16 %v522, %v520
    %v567 = vpack.c.b16 %v525, %v523
    %v568 = vpack.c.b16 %v526, %v524
    %v569 = vpack.c.b16 %v529, %v527
    %v570 = vpack.c.b16 %v530, %v528
    %v571 = vpack.c.b16 %v533, %v531
    %v572 = vpack.c.b16 %v534, %v532
    %v573 = vpack.c.b16 %v537, %v535
    %v574 = vpack.c.b16 %v538, %v536
    %v575 = vpack.c.b16 %v541, %v539
    %v576 = vpack.c.b16 %v542, %v540
    %v577 = vpack.c.b16 %v545, %v543
    %v578 = vpack.c.b16 %v546, %v544
    %611 = vmatpush.bf16.msra.mxu0 %v561
    %612 = vmatpush.bf16.msra.mxu0 %v559
    %613 = vmatpush.bf16.msra.mxu0 %v557
    %614 = vmatpush.bf16.msra.mxu0 %v555
    %615 = vmatpush.bf16.msra.mxu0 %v553
    %616 = vmatpush.bf16.msra.mxu0 %v551
    %617 = vmatpush.bf16.msra.mxu0 %v549
    %618 = vmatpush.bf16.msra.mxu0 %v547
    %619 = vmatmul.bf16.gmra.mxu0 %v381
    %v620 = vpop.f32.mrf.mxu0
    %v621 = vadd.f32 %v449, %v620
    %v622 = vpop.f32.mrf.mxu0
    %v623 = vadd.f32 %v449, %v622
    %624 = vmatmul.bf16.gmra.mxu0 %v383
    %v625 = vpop.f32.mrf.mxu0
    %v626 = vadd.f32 %v449, %v625
    %v627 = vpop.f32.mrf.mxu0
    %v628 = vadd.f32 %v449, %v627
    %629 = vmatmul.bf16.gmra.mxu0 %v385
    %v630 = vpop.f32.mrf.mxu0
    %v631 = vadd.f32 %v449, %v630
    %v632 = vpop.f32.mrf.mxu0
    %v633 = vadd.f32 %v449, %v632
    %634 = vmatmul.bf16.gmra.mxu0 %v387
    %v635 = vpop.f32.mrf.mxu0
    %v636 = vadd.f32 %v449, %v635
    %v637 = vpop.f32.mrf.mxu0
    %v638 = vadd.f32 %v449, %v637
    %639 = vmatmul.bf16.gmra.mxu0 %v389
    %v640 = vpop.f32.mrf.mxu0
    %v641 = vadd.f32 %v449, %v640
    %v642 = vpop.f32.mrf.mxu0
    %v643 = vadd.f32 %v449, %v642
    %644 = vmatmul.bf16.gmra.mxu0 %v391
    %v645 = vpop.f32.mrf.mxu0
    %v646 = vadd.f32 %v449, %v645
    %v647 = vpop.f32.mrf.mxu0
    %v648 = vadd.f32 %v449, %v647
    %649 = vmatmul.bf16.gmra.mxu0 %v393
    %v650 = vpop.f32.mrf.mxu0
    %v651 = vadd.f32 %v449, %v650
    %v652 = vpop.f32.mrf.mxu0
    %v653 = vadd.f32 %v449, %v652
    %654 = vmatmul.bf16.gmra.mxu0 %v395
    %v655 = vpop.f32.mrf.mxu0
    %v656 = vadd.f32 %v449, %v655
    %v657 = vpop.f32.mrf.mxu0
    %v658 = vadd.f32 %v449, %v657
    %659 = vmatmul.bf16.gmra.mxu0 %v397
    %v660 = vpop.f32.mrf.mxu0
    %v661 = vadd.f32 %v449, %v660
    %v662 = vpop.f32.mrf.mxu0
    %v663 = vadd.f32 %v449, %v662
    %664 = vmatmul.bf16.gmra.mxu0 %v399
    %v665 = vpop.f32.mrf.mxu0
    %v666 = vadd.f32 %v449, %v665
    %v667 = vpop.f32.mrf.mxu0
    %v668 = vadd.f32 %v449, %v667
    %669 = vmatmul.bf16.gmra.mxu0 %v401
    %v670 = vpop.f32.mrf.mxu0
    %v671 = vadd.f32 %v449, %v670
    %v672 = vpop.f32.mrf.mxu0
    %v673 = vadd.f32 %v449, %v672
    %674 = vmatmul.bf16.gmra.mxu0 %v403
    %v675 = vpop.f32.mrf.mxu0
    %v676 = vadd.f32 %v449, %v675
    %v677 = vpop.f32.mrf.mxu0
    %v678 = vadd.f32 %v449, %v677
    %679 = vmatmul.bf16.gmra.mxu0 %v405
    %v680 = vpop.f32.mrf.mxu0
    %v681 = vadd.f32 %v449, %v680
    %v682 = vpop.f32.mrf.mxu0
    %v683 = vadd.f32 %v449, %v682
    %684 = vmatmul.bf16.gmra.mxu0 %v407
    %v685 = vpop.f32.mrf.mxu0
    %v686 = vadd.f32 %v449, %v685
    %v687 = vpop.f32.mrf.mxu0
    %v688 = vadd.f32 %v449, %v687
    %689 = vmatmul.bf16.gmra.mxu0 %v409
    %v690 = vpop.f32.mrf.mxu0
    %v691 = vadd.f32 %v449, %v690
    %v692 = vpop.f32.mrf.mxu0
    %v693 = vadd.f32 %v449, %v692
    %694 = vmatmul.bf16.gmra.mxu0 %v411
    %v695 = vpop.f32.mrf.mxu0
    %v696 = vadd.f32 %v449, %v695
    %v697 = vpop.f32.mrf.mxu0
    %v698 = vadd.f32 %v449, %v697
    %699 = vdwg.mxu0
    %700 = vmatpush.bf16.msra.mxu0 %v577
    %701 = vmatpush.bf16.msra.mxu0 %v575
    %702 = vmatpush.bf16.msra.mxu0 %v573
    %703 = vmatpush.bf16.msra.mxu0 %v571
    %704 = vmatpush.bf16.msra.mxu0 %v569
    %705 = vmatpush.bf16.msra.mxu0 %v567
    %706 = vmatpush.bf16.msra.mxu0 %v565
    %707 = vmatpush.bf16.msra.mxu0 %v563
    %708 = vmatmul.bf16.gmra.mxu0 %v382
    %v709 = vpop.f32.mrf.mxu0
    %v710 = vadd.f32 %v621, %v709
    %v711 = vpop.f32.mrf.mxu0
    %v712 = vadd.f32 %v623, %v711
    %713 = vmatmul.bf16.gmra.mxu0 %v384
    %v714 = vpop.f32.mrf.mxu0
    %v715 = vadd.f32 %v626, %v714
    %v716 = vpop.f32.mrf.mxu0
    %v717 = vadd.f32 %v628, %v716
    %718 = vmatmul.bf16.gmra.mxu0 %v386
    %v719 = vpop.f32.mrf.mxu0
    %v720 = vadd.f32 %v631, %v719
    %v721 = vpop.f32.mrf.mxu0
    %v722 = vadd.f32 %v633, %v721
    %723 = vmatmul.bf16.gmra.mxu0 %v388
    %v724 = vpop.f32.mrf.mxu0
    %v725 = vadd.f32 %v636, %v724
    %v726 = vpop.f32.mrf.mxu0
    %v727 = vadd.f32 %v638, %v726
    %728 = vmatmul.bf16.gmra.mxu0 %v390
    %v729 = vpop.f32.mrf.mxu0
    %v730 = vadd.f32 %v641, %v729
    %v731 = vpop.f32.mrf.mxu0
    %v732 = vadd.f32 %v643, %v731
    %733 = vmatmul.bf16.gmra.mxu0 %v392
    %v734 = vpop.f32.mrf.mxu0
    %v735 = vadd.f32 %v646, %v734
    %v736 = vpop.f32.mrf.mxu0
    %v737 = vadd.f32 %v648, %v736
    %738 = vmatmul.bf16.gmra.mxu0 %v394
    %v739 = vpop.f32.mrf.mxu0
    %v740 = vadd.f32 %v651, %v739
    %v741 = vpop.f32.mrf.mxu0
    %v742 = vadd.f32 %v653, %v741
    %743 = vmatmul.bf16.gmra.mxu0 %v396
    %v744 = vpop.f32.mrf.mxu0
    %v745 = vadd.f32 %v656, %v744
    %v746 = vpop.f32.mrf.mxu0
    %v747 = vadd.f32 %v658, %v746
    %748 = vmatmul.bf16.gmra.mxu0 %v398
    %v749 = vpop.f32.mrf.mxu0
    %v750 = vadd.f32 %v661, %v749
    %v751 = vpop.f32.mrf.mxu0
    %v752 = vadd.f32 %v663, %v751
    %753 = vmatmul.bf16.gmra.mxu0 %v400
    %v754 = vpop.f32.mrf.mxu0
    %v755 = vadd.f32 %v666, %v754
    %v756 = vpop.f32.mrf.mxu0
    %v757 = vadd.f32 %v668, %v756
    %758 = vmatmul.bf16.gmra.mxu0 %v402
    %v759 = vpop.f32.mrf.mxu0
    %v760 = vadd.f32 %v671, %v759
    %v761 = vpop.f32.mrf.mxu0
    %v762 = vadd.f32 %v673, %v761
    %763 = vmatmul.bf16.gmra.mxu0 %v404
    %v764 = vpop.f32.mrf.mxu0
    %v765 = vadd.f32 %v676, %v764
    %v766 = vpop.f32.mrf.mxu0
    %v767 = vadd.f32 %v678, %v766
    %768 = vmatmul.bf16.gmra.mxu0 %v406
    %v769 = vpop.f32.mrf.mxu0
    %v770 = vadd.f32 %v681, %v769
    %v771 = vpop.f32.mrf.mxu0
    %v772 = vadd.f32 %v683, %v771
    %773 = vmatmul.bf16.gmra.mxu0 %v408
    %v774 = vpop.f32.mrf.mxu0
    %v775 = vadd.f32 %v686, %v774
    %v776 = vpop.f32.mrf.mxu0
    %v777 = vadd.f32 %v688, %v776
    %778 = vmatmul.bf16.gmra.mxu0 %v410
    %v779 = vpop.f32.mrf.mxu0
    %v780 = vadd.f32 %v691, %v779
    %v781 = vpop.f32.mrf.mxu0
    %v782 = vadd.f32 %v693, %v781
    %783 = vmatmul.bf16.gmra.mxu0 %v412
    %v784 = vpop.f32.mrf.mxu0
    %v785 = vadd.f32 %v696, %v784
    %v786 = vpop.f32.mrf.mxu0
    %v787 = vadd.f32 %v698, %v786
    %788 = vdwg.mxu0
    %789 = vmatpush.bf16.msra.mxu0 %v562
    %790 = vmatpush.bf16.msra.mxu0 %v560
    %791 = vmatpush.bf16.msra.mxu0 %v558
    %792 = vmatpush.bf16.msra.mxu0 %v556
    %793 = vmatpush.bf16.msra.mxu0 %v554
    %794 = vmatpush.bf16.msra.mxu0 %v552
    %795 = vmatpush.bf16.msra.mxu0 %v550
    %796 = vmatpush.bf16.msra.mxu0 %v548
    %797 = vmatmul.bf16.gmra.mxu0 %v381
    %v798 = vpop.f32.mrf.mxu0
    %v799 = vadd.f32 %v450, %v798
    %v800 = vpop.f32.mrf.mxu0
    %v801 = vadd.f32 %v450, %v800
    %802 = vmatmul.bf16.gmra.mxu0 %v383
    %v803 = vpop.f32.mrf.mxu0
    %v804 = vadd.f32 %v450, %v803
    %v805 = vpop.f32.mrf.mxu0
    %v806 = vadd.f32 %v450, %v805
    %807 = vmatmul.bf16.gmra.mxu0 %v385
    %v808 = vpop.f32.mrf.mxu0
    %v809 = vadd.f32 %v450, %v808
    %v810 = vpop.f32.mrf.mxu0
    %v811 = vadd.f32 %v450, %v810
    %812 = vmatmul.bf16.gmra.mxu0 %v387
    %v813 = vpop.f32.mrf.mxu0
    %v814 = vadd.f32 %v450, %v813
    %v815 = vpop.f32.mrf.mxu0
    %v816 = vadd.f32 %v450, %v815
    %817 = vmatmul.bf16.gmra.mxu0 %v389
    %v818 = vpop.f32.mrf.mxu0
    %v819 = vadd.f32 %v450, %v818
    %v820 = vpop.f32.mrf.mxu0
    %v821 = vadd.f32 %v450, %v820
    %822 = vmatmul.bf16.gmra.mxu0 %v391
    %v823 = vpop.f32.mrf.mxu0
    %v824 = vadd.f32 %v450, %v823
    %v825 = vpop.f32.mrf.mxu0
    %v826 = vadd.f32 %v450, %v825
    %827 = vmatmul.bf16.gmra.mxu0 %v393
    %v828 = vpop.f32.mrf.mxu0
    %v829 = vadd.f32 %v450, %v828
    %v830 = vpop.f32.mrf.mxu0
    %v831 = vadd.f32 %v450, %v830
    %832 = vmatmul.bf16.gmra.mxu0 %v395
    %v833 = vpop.f32.mrf.mxu0
    %v834 = vadd.f32 %v450, %v833
    %v835 = vpop.f32.mrf.mxu0
    %v836 = vadd.f32 %v450, %v835
    %837 = vmatmul.bf16.gmra.mxu0 %v397
    %v838 = vpop.f32.mrf.mxu0
    %v839 = vadd.f32 %v450, %v838
    %v840 = vpop.f32.mrf.mxu0
    %v841 = vadd.f32 %v450, %v840
    %842 = vmatmul.bf16.gmra.mxu0 %v399
    %v843 = vpop.f32.mrf.mxu0
    %v844 = vadd.f32 %v450, %v843
    %v845 = vpop.f32.mrf.mxu0
    %v846 = vadd.f32 %v450, %v845
    %847 = vmatmul.bf16.gmra.mxu0 %v401
    %v848 = vpop.f32.mrf.mxu0
    %v849 = vadd.f32 %v450, %v848
    %v850 = vpop.f32.mrf.mxu0
    %v851 = vadd.f32 %v450, %v850
    %852 = vmatmul.bf16.gmra.mxu0 %v403
    %v853 = vpop.f32.mrf.mxu0
    %v854 = vadd.f32 %v450, %v853
    %v855 = vpop.f32.mrf.mxu0
    %v856 = vadd.f32 %v450, %v855
    %857 = vmatmul.bf16.gmra.mxu0 %v405
    %v858 = vpop.f32.mrf.mxu0
    %v859 = vadd.f32 %v450, %v858
    %v860 = vpop.f32.mrf.mxu0
    %v861 = vadd.f32 %v450, %v860
    %862 = vmatmul.bf16.gmra.mxu0 %v407
    %v863 = vpop.f32.mrf.mxu0
    %v864 = vadd.f32 %v450, %v863
    %v865 = vpop.f32.mrf.mxu0
    %v866 = vadd.f32 %v450, %v865
    %867 = vmatmul.bf16.gmra.mxu0 %v409
    %v868 = vpop.f32.mrf.mxu0
    %v869 = vadd.f32 %v450, %v868
    %v870 = vpop.f32.mrf.mxu0
    %v871 = vadd.f32 %v450, %v870
    %872 = vmatmul.bf16.gmra.mxu0 %v411
    %v873 = vpop.f32.mrf.mxu0
    %v874 = vadd.f32 %v450, %v873
    %v875 = vpop.f32.mrf.mxu0
    %v876 = vadd.f32 %v450, %v875
    %877 = vdwg.mxu0
    %878 = vmatpush.bf16.msra.mxu0 %v578
    %879 = vmatpush.bf16.msra.mxu0 %v576
    %880 = vmatpush.bf16.msra.mxu0 %v574
    %881 = vmatpush.bf16.msra.mxu0 %v572
    %882 = vmatpush.bf16.msra.mxu0 %v570
    %883 = vmatpush.bf16.msra.mxu0 %v568
    %884 = vmatpush.bf16.msra.mxu0 %v566
    %885 = vmatpush.bf16.msra.mxu0 %v564
    %886 = vmatmul.bf16.gmra.mxu0 %v382
    %v887 = vpop.f32.mrf.mxu0
    %v888 = vadd.f32 %v799, %v887
    %v889 = vpop.f32.mrf.mxu0
    %v890 = vadd.f32 %v801, %v889
    %891 = vmatmul.bf16.gmra.mxu0 %v384
    %v892 = vpop.f32.mrf.mxu0
    %v893 = vadd.f32 %v804, %v892
    %v894 = vpop.f32.mrf.mxu0
    %v895 = vadd.f32 %v806, %v894
    %896 = vmatmul.bf16.gmra.mxu0 %v386
    %v897 = vpop.f32.mrf.mxu0
    %v898 = vadd.f32 %v809, %v897
    %v899 = vpop.f32.mrf.mxu0
    %v900 = vadd.f32 %v811, %v899
    %901 = vmatmul.bf16.gmra.mxu0 %v388
    %v902 = vpop.f32.mrf.mxu0
    %v903 = vadd.f32 %v814, %v902
    %v904 = vpop.f32.mrf.mxu0
    %v905 = vadd.f32 %v816, %v904
    %906 = vmatmul.bf16.gmra.mxu0 %v390
    %v907 = vpop.f32.mrf.mxu0
    %v908 = vadd.f32 %v819, %v907
    %v909 = vpop.f32.mrf.mxu0
    %v910 = vadd.f32 %v821, %v909
    %911 = vmatmul.bf16.gmra.mxu0 %v392
    %v912 = vpop.f32.mrf.mxu0
    %v913 = vadd.f32 %v824, %v912
    %v914 = vpop.f32.mrf.mxu0
    %v915 = vadd.f32 %v826, %v914
    %916 = vmatmul.bf16.gmra.mxu0 %v394
    %v917 = vpop.f32.mrf.mxu0
    %v918 = vadd.f32 %v829, %v917
    %v919 = vpop.f32.mrf.mxu0
    %v920 = vadd.f32 %v831, %v919
    %921 = vmatmul.bf16.gmra.mxu0 %v396
    %v922 = vpop.f32.mrf.mxu0
    %v923 = vadd.f32 %v834, %v922
    %v924 = vpop.f32.mrf.mxu0
    %v925 = vadd.f32 %v836, %v924
    %926 = vmatmul.bf16.gmra.mxu0 %v398
    %v927 = vpop.f32.mrf.mxu0
    %v928 = vadd.f32 %v839, %v927
    %v929 = vpop.f32.mrf.mxu0
    %v930 = vadd.f32 %v841, %v929
    %931 = vmatmul.bf16.gmra.mxu0 %v400
    %v932 = vpop.f32.mrf.mxu0
    %v933 = vadd.f32 %v844, %v932
    %v934 = vpop.f32.mrf.mxu0
    %v935 = vadd.f32 %v846, %v934
    %936 = vmatmul.bf16.gmra.mxu0 %v402
    %v937 = vpop.f32.mrf.mxu0
    %v938 = vadd.f32 %v849, %v937
    %v939 = vpop.f32.mrf.mxu0
    %v940 = vadd.f32 %v851, %v939
    %941 = vmatmul.bf16.gmra.mxu0 %v404
    %v942 = vpop.f32.mrf.mxu0
    %v943 = vadd.f32 %v854, %v942
    %v944 = vpop.f32.mrf.mxu0
    %v945 = vadd.f32 %v856, %v944
    %946 = vmatmul.bf16.gmra.mxu0 %v406
    %v947 = vpop.f32.mrf.mxu0
    %v948 = vadd.f32 %v859, %v947
    %v949 = vpop.f32.mrf.mxu0
    %v950 = vadd.f32 %v861, %v949
    %951 = vmatmul.bf16.gmra.mxu0 %v408
    %v952 = vpop.f32.mrf.mxu0
    %v953 = vadd.f32 %v864, %v952
    %v954 = vpop.f32.mrf.mxu0
    %v955 = vadd.f32 %v866, %v954
    %956 = vmatmul.bf16.gmra.mxu0 %v410
    %v957 = vpop.f32.mrf.mxu0
    %v958 = vadd.f32 %v869, %v957
    %v959 = vpop.f32.mrf.mxu0
    %v960 = vadd.f32 %v871, %v959
    %961 = vmatmul.bf16.gmra.mxu0 %v412
    %v962 = vpop.f32.mrf.mxu0
    %v963 = vadd.f32 %v874, %v962
    %v964 = vpop.f32.mrf.mxu0
    %v965 = vadd.f32 %v876, %v964
    %966 = vdwg.mxu0
    %v967 = vmax.f32 %v710, 0.0
    %v968 = vmax.f32 %v888, 0.0
    %v969 = vmax.f32 %v712, 0.0
    %v970 = vmax.f32 %v890, 0.0
    %v971 = vmax.f32 %v715, 0.0
    %v972 = vmax.f32 %v893, 0.0
    %v973 = vmax.f32 %v717, 0.0
    %v974 = vmax.f32 %v895, 0.0
    %v975 = vmax.f32 %v720, 0.0
    %v976 = vmax.f32 %v898, 0.0
    %v977 = vmax.f32 %v722, 0.0
    %v978 = vmax.f32 %v900, 0.0
    %v979 = vmax.f32 %v725, 0.0
    %v980 = vmax.f32 %v903, 0.0
    %v981 = vmax.f32 %v727, 0.0
    %v982 = vmax.f32 %v905, 0.0
    %v983 = vmax.f32 %v730, 0.0
    %v984 = vmax.f32 %v908, 0.0
    %v985 = vmax.f32 %v732, 0.0
    %v986 = vmax.f32 %v910, 0.0
    %v987 = vmax.f32 %v735, 0.0
    %v988 = vmax.f32 %v913, 0.0
    %v989 = vmax.f32 %v737, 0.0
    %v990 = vmax.f32 %v915, 0.0
    %v991 = vmax.f32 %v740, 0.0
    %v992 = vmax.f32 %v918, 0.0
    %v993 = vmax.f32 %v742, 0.0
    %v994 = vmax.f32 %v920, 0.0
    %v995 = vmax.f32 %v745, 0.0
    %v996 = vmax.f32 %v923, 0.0
    %v997 = vmax.f32 %v747, 0.0
    %v998 = vmax.f32 %v925, 0.0
    %v999 = vmax.f32 %v750, 0.0
    %v1000 = vmax.f32 %v928, 0.0
    %v1001 = vmax.f32 %v752, 0.0
    %v1002 = vmax.f32 %v930, 0.0
    %v1003 = vmax.f32 %v755, 0.0
    %v1004 = vmax.f32 %v933, 0.0
    %v1005 = vmax.f32 %v757, 0.0
    %v1006 = vmax.f32 %v935, 0.0
    %v1007 = vmax.f32 %v760, 0.0
    %v1008 = vmax.f32 %v938, 0.0
    %v1009 = vmax.f32 %v762, 0.0
    %v1010 = vmax.f32 %v940, 0.0
    %v1011 = vmax.f32 %v765, 0.0
    %v1012 = vmax.f32 %v943, 0.0
    %v1013 = vmax.f32 %v767, 0.0
    %v1014 = vmax.f32 %v945, 0.0
    %v1015 = vmax.f32 %v770, 0.0
    %v1016 = vmax.f32 %v948, 0.0
    %v1017 = vmax.f32 %v772, 0.0
    %v1018 = vmax.f32 %v950, 0.0
    %v1019 = vmax.f32 %v775, 0.0
    %v1020 = vmax.f32 %v953, 0.0
    %v1021 = vmax.f32 %v777, 0.0
    %v1022 = vmax.f32 %v955, 0.0
    %v1023 = vmax.f32 %v780, 0.0
    %v1024 = vmax.f32 %v958, 0.0
    %v1025 = vmax.f32 %v782, 0.0
    %v1026 = vmax.f32 %v960, 0.0
    %v1027 = vmax.f32 %v785, 0.0
    %v1028 = vmax.f32 %v963, 0.0
    %v1029 = vmax.f32 %v787, 0.0
    %v1030 = vmax.f32 %v965, 0.0
    %v1031 = vpack.c.bf16 %v969, %v967
    %v1032 = vpack.c.bf16 %v970, %v968
    %v1033 = vpack.c.bf16 %v973, %v971
    %v1034 = vpack.c.bf16 %v974, %v972
    %v1035 = vpack.c.bf16 %v977, %v975
    %v1036 = vpack.c.bf16 %v978, %v976
    %v1037 = vpack.c.bf16 %v981, %v979
    %v1038 = vpack.c.bf16 %v982, %v980
    %v1039 = vpack.c.bf16 %v985, %v983
    %v1040 = vpack.c.bf16 %v986, %v984
    %v1041 = vpack.c.bf16 %v989, %v987
    %v1042 = vpack.c.bf16 %v990, %v988
    %v1043 = vpack.c.bf16 %v993, %v991
    %v1044 = vpack.c.bf16 %v994, %v992
    %v1045 = vpack.c.bf16 %v997, %v995
    %v1046 = vpack.c.bf16 %v998, %v996
    %v1047 = vpack.c.bf16 %v1001, %v999
    %v1048 = vpack.c.bf16 %v1002, %v1000
    %v1049 = vpack.c.bf16 %v1005, %v1003
    %v1050 = vpack.c.bf16 %v1006, %v1004
    %v1051 = vpack.c.bf16 %v1009, %v1007
    %v1052 = vpack.c.bf16 %v1010, %v1008
    %v1053 = vpack.c.bf16 %v1013, %v1011
    %v1054 = vpack.c.bf16 %v1014, %v1012
    %v1055 = vpack.c.bf16 %v1017, %v1015
    %v1056 = vpack.c.bf16 %v1018, %v1016
    %v1057 = vpack.c.bf16 %v1021, %v1019
    %v1058 = vpack.c.bf16 %v1022, %v1020
    %v1059 = vpack.c.bf16 %v1025, %v1023
    %v1060 = vpack.c.bf16 %v1026, %v1024
    %v1061 = vpack.c.bf16 %v1029, %v1027
    %v1062 = vpack.c.bf16 %v1030, %v1028
    %v1063 = vld [vmem:[%s3] sm:$0xf]
    %v1064 = vld [vmem:[%s3 + $0x4] sm:$0xf]
    %v1065 = vld [vmem:[%s3 + $0x8] sm:$0xf]
    %v1066 = vld [vmem:[%s3 + $0xc] sm:$0xf]
    %v1067 = vld [vmem:[%s3 + $0x10] sm:$0xf]
    %v1068 = vld [vmem:[%s3 + $0x14] sm:$0xf]
    %v1069 = vld [vmem:[%s3 + $0x18] sm:$0xf]
    %v1070 = vld [vmem:[%s3 + $0x1c] sm:$0xf]
    %v1071 = vld [vmem:[%s3 + $0x20] sm:$0xf]
    %v1072 = vld [vmem:[%s3 + $0x24] sm:$0xf]
    %v1073 = vld [vmem:[%s3 + $0x28] sm:$0xf]
    %v1074 = vld [vmem:[%s3 + $0x2c] sm:$0xf]
    %v1075 = vld [vmem:[%s3 + $0x30] sm:$0xf]
    %v1076 = vld [vmem:[%s3 + $0x34] sm:$0xf]
    %v1077 = vld [vmem:[%s3 + $0x38] sm:$0xf]
    %v1078 = vld [vmem:[%s3 + $0x3c] sm:$0xf]
    %v1079 = vld [vmem:[%s3 + $0x40] sm:$0xf]
    %v1080 = vld [vmem:[%s3 + $0x44] sm:$0xf]
    %v1081 = vld [vmem:[%s3 + $0x48] sm:$0xf]
    %v1082 = vld [vmem:[%s3 + $0x4c] sm:$0xf]
    %v1083 = vld [vmem:[%s3 + $0x50] sm:$0xf]
    %v1084 = vld [vmem:[%s3 + $0x54] sm:$0xf]
    %v1085 = vld [vmem:[%s3 + $0x58] sm:$0xf]
    %v1086 = vld [vmem:[%s3 + $0x5c] sm:$0xf]
    %v1087 = vld [vmem:[%s3 + $0x60] sm:$0xf]
    %v1088 = vld [vmem:[%s3 + $0x64] sm:$0xf]
    %v1089 = vld [vmem:[%s3 + $0x68] sm:$0xf]
    %v1090 = vld [vmem:[%s3 + $0x6c] sm:$0xf]
    %v1091 = vld [vmem:[%s3 + $0x70] sm:$0xf]
    %v1092 = vld [vmem:[%s3 + $0x74] sm:$0xf]
    %v1093 = vld [vmem:[%s3 + $0x78] sm:$0xf]
    %v1094 = vld [vmem:[%s3 + $0x7c] sm:$0xf]
    %v1095 = vperm.slane %v70, 2
    %v1128 = vunpack.c.l.b16 %v1063
    %v1129 = vunpack.c.l.b16 %v1064
    %v1130 = vunpack.c.l.b16 %v1065
    %v1131 = vunpack.c.l.b16 %v1066
    %v1132 = vunpack.c.l.b16 %v1067
    %v1133 = vunpack.c.l.b16 %v1068
    %v1134 = vunpack.c.l.b16 %v1069
    %v1135 = vunpack.c.l.b16 %v1070
    %v1136 = vunpack.c.l.b16 %v1071
    %v1137 = vunpack.c.l.b16 %v1072
    %v1138 = vunpack.c.l.b16 %v1073
    %v1139 = vunpack.c.l.b16 %v1074
    %v1140 = vunpack.c.l.b16 %v1075
    %v1141 = vunpack.c.l.b16 %v1076
    %v1142 = vunpack.c.l.b16 %v1077
    %v1143 = vunpack.c.l.b16 %v1078
    %v1144 = vunpack.c.l.b16 %v1079
    %v1145 = vunpack.c.l.b16 %v1080
    %v1146 = vunpack.c.l.b16 %v1081
    %v1147 = vunpack.c.l.b16 %v1082
    %v1148 = vunpack.c.l.b16 %v1083
    %v1149 = vunpack.c.l.b16 %v1084
    %v1150 = vunpack.c.l.b16 %v1085
    %v1151 = vunpack.c.l.b16 %v1086
    %v1152 = vunpack.c.l.b16 %v1087
    %v1153 = vunpack.c.l.b16 %v1088
    %v1154 = vunpack.c.l.b16 %v1089
    %v1155 = vunpack.c.l.b16 %v1090
    %v1156 = vunpack.c.l.b16 %v1091
    %v1157 = vunpack.c.l.b16 %v1092
    %v1158 = vunpack.c.l.b16 %v1093
    %v1159 = vunpack.c.l.b16 %v1094
    %v1160 = vpack.c.b16 %v1129, %v1128
    %v1161 = vpack.c.b16 %v1131, %v1130
    %v1162 = vpack.c.b16 %v1133, %v1132
    %v1163 = vpack.c.b16 %v1135, %v1134
    %v1164 = vpack.c.b16 %v1137, %v1136
    %v1165 = vpack.c.b16 %v1139, %v1138
    %v1166 = vpack.c.b16 %v1141, %v1140
    %v1167 = vpack.c.b16 %v1143, %v1142
    %v1168 = vpack.c.b16 %v1145, %v1144
    %v1169 = vpack.c.b16 %v1147, %v1146
    %v1170 = vpack.c.b16 %v1149, %v1148
    %v1171 = vpack.c.b16 %v1151, %v1150
    %v1172 = vpack.c.b16 %v1153, %v1152
    %v1173 = vpack.c.b16 %v1155, %v1154
    %v1174 = vpack.c.b16 %v1157, %v1156
    %v1175 = vpack.c.b16 %v1159, %v1158
    %1192 = vmatpush.bf16.msra.mxu0 %v1167
    %1193 = vmatpush.bf16.msra.mxu0 %v1166
    %1194 = vmatpush.bf16.msra.mxu0 %v1165
    %1195 = vmatpush.bf16.msra.mxu0 %v1164
    %1196 = vmatpush.bf16.msra.mxu0 %v1163
    %1197 = vmatpush.bf16.msra.mxu0 %v1162
    %1198 = vmatpush.bf16.msra.mxu0 %v1161
    %1199 = vmatpush.bf16.msra.mxu0 %v1160
    %1200 = vmatmul.bf16.gmra.mxu0 %v1031
    %v1201 = vpop.f32.mrf.mxu0
    %v1202 = vadd.f32 %v1095, %v1201
    %v1203 = vpop.f32.mrf.mxu0
    %v1204 = vadd.f32 %v1095, %v1203
    %1205 = vmatmul.bf16.gmra.mxu0 %v1033
    %v1206 = vpop.f32.mrf.mxu0
    %v1207 = vadd.f32 %v1095, %v1206
    %v1208 = vpop.f32.mrf.mxu0
    %v1209 = vadd.f32 %v1095, %v1208
    %1210 = vmatmul.bf16.gmra.mxu0 %v1035
    %v1211 = vpop.f32.mrf.mxu0
    %v1212 = vadd.f32 %v1095, %v1211
    %v1213 = vpop.f32.mrf.mxu0
    %v1214 = vadd.f32 %v1095, %v1213
    %1215 = vmatmul.bf16.gmra.mxu0 %v1037
    %v1216 = vpop.f32.mrf.mxu0
    %v1217 = vadd.f32 %v1095, %v1216
    %v1218 = vpop.f32.mrf.mxu0
    %v1219 = vadd.f32 %v1095, %v1218
    %1220 = vmatmul.bf16.gmra.mxu0 %v1039
    %v1221 = vpop.f32.mrf.mxu0
    %v1222 = vadd.f32 %v1095, %v1221
    %v1223 = vpop.f32.mrf.mxu0
    %v1224 = vadd.f32 %v1095, %v1223
    %1225 = vmatmul.bf16.gmra.mxu0 %v1041
    %v1226 = vpop.f32.mrf.mxu0
    %v1227 = vadd.f32 %v1095, %v1226
    %v1228 = vpop.f32.mrf.mxu0
    %v1229 = vadd.f32 %v1095, %v1228
    %1230 = vmatmul.bf16.gmra.mxu0 %v1043
    %v1231 = vpop.f32.mrf.mxu0
    %v1232 = vadd.f32 %v1095, %v1231
    %v1233 = vpop.f32.mrf.mxu0
    %v1234 = vadd.f32 %v1095, %v1233
    %1235 = vmatmul.bf16.gmra.mxu0 %v1045
    %v1236 = vpop.f32.mrf.mxu0
    %v1237 = vadd.f32 %v1095, %v1236
    %v1238 = vpop.f32.mrf.mxu0
    %v1239 = vadd.f32 %v1095, %v1238
    %1240 = vmatmul.bf16.gmra.mxu0 %v1047
    %v1241 = vpop.f32.mrf.mxu0
    %v1242 = vadd.f32 %v1095, %v1241
    %v1243 = vpop.f32.mrf.mxu0
    %v1244 = vadd.f32 %v1095, %v1243
    %1245 = vmatmul.bf16.gmra.mxu0 %v1049
    %v1246 = vpop.f32.mrf.mxu0
    %v1247 = vadd.f32 %v1095, %v1246
    %v1248 = vpop.f32.mrf.mxu0
    %v1249 = vadd.f32 %v1095, %v1248
    %1250 = vmatmul.bf16.gmra.mxu0 %v1051
    %v1251 = vpop.f32.mrf.mxu0
    %v1252 = vadd.f32 %v1095, %v1251
    %v1253 = vpop.f32.mrf.mxu0
    %v1254 = vadd.f32 %v1095, %v1253
    %1255 = vmatmul.bf16.gmra.mxu0 %v1053
    %v1256 = vpop.f32.mrf.mxu0
    %v1257 = vadd.f32 %v1095, %v1256
    %v1258 = vpop.f32.mrf.mxu0
    %v1259 = vadd.f32 %v1095, %v1258
    %1260 = vmatmul.bf16.gmra.mxu0 %v1055
    %v1261 = vpop.f32.mrf.mxu0
    %v1262 = vadd.f32 %v1095, %v1261
    %v1263 = vpop.f32.mrf.mxu0
    %v1264 = vadd.f32 %v1095, %v1263
    %1265 = vmatmul.bf16.gmra.mxu0 %v1057
    %v1266 = vpop.f32.mrf.mxu0
    %v1267 = vadd.f32 %v1095, %v1266
    %v1268 = vpop.f32.mrf.mxu0
    %v1269 = vadd.f32 %v1095, %v1268
    %1270 = vmatmul.bf16.gmra.mxu0 %v1059
    %v1271 = vpop.f32.mrf.mxu0
    %v1272 = vadd.f32 %v1095, %v1271
    %v1273 = vpop.f32.mrf.mxu0
    %v1274 = vadd.f32 %v1095, %v1273
    %1275 = vmatmul.bf16.gmra.mxu0 %v1061
    %v1276 = vpop.f32.mrf.mxu0
    %v1277 = vadd.f32 %v1095, %v1276
    %v1278 = vpop.f32.mrf.mxu0
    %v1279 = vadd.f32 %v1095, %v1278
    %1280 = vdwg.mxu0
    %1281 = vmatpush.bf16.msra.mxu0 %v1175
    %1282 = vmatpush.bf16.msra.mxu0 %v1174
    %1283 = vmatpush.bf16.msra.mxu0 %v1173
    %1284 = vmatpush.bf16.msra.mxu0 %v1172
    %1285 = vmatpush.bf16.msra.mxu0 %v1171
    %1286 = vmatpush.bf16.msra.mxu0 %v1170
    %1287 = vmatpush.bf16.msra.mxu0 %v1169
    %1288 = vmatpush.bf16.msra.mxu0 %v1168
    %1289 = vmatmul.bf16.gmra.mxu0 %v1032
    %v1290 = vpop.f32.mrf.mxu0
    %v1291 = vadd.f32 %v1202, %v1290
    %v1292 = vpop.f32.mrf.mxu0
    %v1293 = vadd.f32 %v1204, %v1292
    %1294 = vmatmul.bf16.gmra.mxu0 %v1034
    %v1295 = vpop.f32.mrf.mxu0
    %v1296 = vadd.f32 %v1207, %v1295
    %v1297 = vpop.f32.mrf.mxu0
    %v1298 = vadd.f32 %v1209, %v1297
    %1299 = vmatmul.bf16.gmra.mxu0 %v1036
    %v1300 = vpop.f32.mrf.mxu0
    %v1301 = vadd.f32 %v1212, %v1300
    %v1302 = vpop.f32.mrf.mxu0
    %v1303 = vadd.f32 %v1214, %v1302
    %1304 = vmatmul.bf16.gmra.mxu0 %v1038
    %v1305 = vpop.f32.mrf.mxu0
    %v1306 = vadd.f32 %v1217, %v1305
    %v1307 = vpop.f32.mrf.mxu0
    %v1308 = vadd.f32 %v1219, %v1307
    %1309 = vmatmul.bf16.gmra.mxu0 %v1040
    %v1310 = vpop.f32.mrf.mxu0
    %v1311 = vadd.f32 %v1222, %v1310
    %v1312 = vpop.f32.mrf.mxu0
    %v1313 = vadd.f32 %v1224, %v1312
    %1314 = vmatmul.bf16.gmra.mxu0 %v1042
    %v1315 = vpop.f32.mrf.mxu0
    %v1316 = vadd.f32 %v1227, %v1315
    %v1317 = vpop.f32.mrf.mxu0
    %v1318 = vadd.f32 %v1229, %v1317
    %1319 = vmatmul.bf16.gmra.mxu0 %v1044
    %v1320 = vpop.f32.mrf.mxu0
    %v1321 = vadd.f32 %v1232, %v1320
    %v1322 = vpop.f32.mrf.mxu0
    %v1323 = vadd.f32 %v1234, %v1322
    %1324 = vmatmul.bf16.gmra.mxu0 %v1046
    %v1325 = vpop.f32.mrf.mxu0
    %v1326 = vadd.f32 %v1237, %v1325
    %v1327 = vpop.f32.mrf.mxu0
    %v1328 = vadd.f32 %v1239, %v1327
    %1329 = vmatmul.bf16.gmra.mxu0 %v1048
    %v1330 = vpop.f32.mrf.mxu0
    %v1331 = vadd.f32 %v1242, %v1330
    %v1332 = vpop.f32.mrf.mxu0
    %v1333 = vadd.f32 %v1244, %v1332
    %1334 = vmatmul.bf16.gmra.mxu0 %v1050
    %v1335 = vpop.f32.mrf.mxu0
    %v1336 = vadd.f32 %v1247, %v1335
    %v1337 = vpop.f32.mrf.mxu0
    %v1338 = vadd.f32 %v1249, %v1337
    %1339 = vmatmul.bf16.gmra.mxu0 %v1052
    %v1340 = vpop.f32.mrf.mxu0
    %v1341 = vadd.f32 %v1252, %v1340
    %v1342 = vpop.f32.mrf.mxu0
    %v1343 = vadd.f32 %v1254, %v1342
    %1344 = vmatmul.bf16.gmra.mxu0 %v1054
    %v1345 = vpop.f32.mrf.mxu0
    %v1346 = vadd.f32 %v1257, %v1345
    %v1347 = vpop.f32.mrf.mxu0
    %v1348 = vadd.f32 %v1259, %v1347
    %1349 = vmatmul.bf16.gmra.mxu0 %v1056
    %v1350 = vpop.f32.mrf.mxu0
    %v1351 = vadd.f32 %v1262, %v1350
    %v1352 = vpop.f32.mrf.mxu0
    %v1353 = vadd.f32 %v1264, %v1352
    %1354 = vmatmul.bf16.gmra.mxu0 %v1058
    %v1355 = vpop.f32.mrf.mxu0
    %v1356 = vadd.f32 %v1267, %v1355
    %v1357 = vpop.f32.mrf.mxu0
    %v1358 = vadd.f32 %v1269, %v1357
    %1359 = vmatmul.bf16.gmra.mxu0 %v1060
    %v1360 = vpop.f32.mrf.mxu0
    %v1361 = vadd.f32 %v1272, %v1360
    %v1362 = vpop.f32.mrf.mxu0
    %v1363 = vadd.f32 %v1274, %v1362
    %1364 = vmatmul.bf16.gmra.mxu0 %v1062
    %v1365 = vpop.f32.mrf.mxu0
    %v1366 = vadd.f32 %v1277, %v1365
    %v1367 = vpop.f32.mrf.mxu0
    %v1368 = vadd.f32 %v1279, %v1367
    %1369 = vdwg.mxu0
    %v1370 = vmul.f32 %v70, 1.442695
    %v1371 = vpow.pop %v1370
    %v1372 = vperm.slane %v1371, 3
    %1405 = vrot.lane.b32.xlu0 %v22, 112
    %v1406 = vpop.permute.xlu0 %1405
    %1407 = vrot.lane.b32.xlu0 %v23, 112
    %v1408 = vpop.permute.xlu0 %1407
    %1409 = vrot.lane.b32.xlu0 %v24, 112
    %v1410 = vpop.permute.xlu0 %1409
    %1411 = vrot.lane.b32.xlu0 %v25, 112
    %v1412 = vpop.permute.xlu0 %1411
    %1413 = vrot.lane.b32.xlu0 %v26, 112
    %v1414 = vpop.permute.xlu0 %1413
    %1415 = vrot.lane.b32.xlu0 %v27, 112
    %v1416 = vpop.permute.xlu0 %1415
    %1417 = vrot.lane.b32.xlu0 %v28, 112
    %v1418 = vpop.permute.xlu0 %1417
    %1419 = vrot.lane.b32.xlu0 %v29, 112
    %v1420 = vpop.permute.xlu0 %1419
    %1421 = vrot.lane.b32.xlu0 %v30, 112
    %v1422 = vpop.permute.xlu0 %1421
    %1423 = vrot.lane.b32.xlu0 %v31, 112
    %v1424 = vpop.permute.xlu0 %1423
    %1425 = vrot.lane.b32.xlu0 %v32, 112
    %v1426 = vpop.permute.xlu0 %1425
    %1427 = vrot.lane.b32.xlu0 %v33, 112
    %v1428 = vpop.permute.xlu0 %1427
    %1429 = vrot.lane.b32.xlu0 %v34, 112
    %v1430 = vpop.permute.xlu0 %1429
    %1431 = vrot.lane.b32.xlu0 %v35, 112
    %v1432 = vpop.permute.xlu0 %1431
    %1433 = vrot.lane.b32.xlu0 %v36, 112
    %v1434 = vpop.permute.xlu0 %1433
    %1435 = vrot.lane.b32.xlu0 %v37, 112
    %v1436 = vpop.permute.xlu0 %1435
    %1437 = vrot.lane.b32.xlu0 %v38, 112
    %v1438 = vpop.permute.xlu0 %1437
    %1439 = vrot.lane.b32.xlu0 %v39, 112
    %v1440 = vpop.permute.xlu0 %1439
    %1441 = vrot.lane.b32.xlu0 %v40, 112
    %v1442 = vpop.permute.xlu0 %1441
    %1443 = vrot.lane.b32.xlu0 %v41, 112
    %v1444 = vpop.permute.xlu0 %1443
    %1445 = vrot.lane.b32.xlu0 %v42, 112
    %v1446 = vpop.permute.xlu0 %1445
    %1447 = vrot.lane.b32.xlu0 %v43, 112
    %v1448 = vpop.permute.xlu0 %1447
    %1449 = vrot.lane.b32.xlu0 %v44, 112
    %v1450 = vpop.permute.xlu0 %1449
    %1451 = vrot.lane.b32.xlu0 %v45, 112
    %v1452 = vpop.permute.xlu0 %1451
    %1453 = vrot.lane.b32.xlu0 %v46, 112
    %v1454 = vpop.permute.xlu0 %1453
    %1455 = vrot.lane.b32.xlu0 %v47, 112
    %v1456 = vpop.permute.xlu0 %1455
    %1457 = vrot.lane.b32.xlu0 %v48, 112
    %v1458 = vpop.permute.xlu0 %1457
    %1459 = vrot.lane.b32.xlu0 %v49, 112
    %v1460 = vpop.permute.xlu0 %1459
    %1461 = vrot.lane.b32.xlu0 %v50, 112
    %v1462 = vpop.permute.xlu0 %1461
    %1463 = vrot.lane.b32.xlu0 %v51, 112
    %v1464 = vpop.permute.xlu0 %1463
    %1465 = vrot.lane.b32.xlu0 %v52, 112
    %v1466 = vpop.permute.xlu0 %1465
    %1467 = vrot.lane.b32.xlu0 %v53, 112
    %v1468 = vpop.permute.xlu0 %1467
    %v1501 = vmul.f32 %v1372, %v1406
    %v1502 = vmul.f32 %v1372, %v1408
    %v1503 = vmul.f32 %v1372, %v1410
    %v1504 = vmul.f32 %v1372, %v1412
    %v1505 = vmul.f32 %v1372, %v1414
    %v1506 = vmul.f32 %v1372, %v1416
    %v1507 = vmul.f32 %v1372, %v1418
    %v1508 = vmul.f32 %v1372, %v1420
    %v1509 = vmul.f32 %v1372, %v1422
    %v1510 = vmul.f32 %v1372, %v1424
    %v1511 = vmul.f32 %v1372, %v1426
    %v1512 = vmul.f32 %v1372, %v1428
    %v1513 = vmul.f32 %v1372, %v1430
    %v1514 = vmul.f32 %v1372, %v1432
    %v1515 = vmul.f32 %v1372, %v1434
    %v1516 = vmul.f32 %v1372, %v1436
    %v1517 = vmul.f32 %v1372, %v1438
    %v1518 = vmul.f32 %v1372, %v1440
    %v1519 = vmul.f32 %v1372, %v1442
    %v1520 = vmul.f32 %v1372, %v1444
    %v1521 = vmul.f32 %v1372, %v1446
    %v1522 = vmul.f32 %v1372, %v1448
    %v1523 = vmul.f32 %v1372, %v1450
    %v1524 = vmul.f32 %v1372, %v1452
    %v1525 = vmul.f32 %v1372, %v1454
    %v1526 = vmul.f32 %v1372, %v1456
    %v1527 = vmul.f32 %v1372, %v1458
    %v1528 = vmul.f32 %v1372, %v1460
    %v1529 = vmul.f32 %v1372, %v1462
    %v1530 = vmul.f32 %v1372, %v1464
    %v1531 = vmul.f32 %v1372, %v1466
    %v1532 = vmul.f32 %v1372, %v1468
    %v1533 = vadd.f32 %v1291, %v1501
    %v1534 = vadd.f32 %v1293, %v1502
    %v1535 = vadd.f32 %v1296, %v1503
    %v1536 = vadd.f32 %v1298, %v1504
    %v1537 = vadd.f32 %v1301, %v1505
    %v1538 = vadd.f32 %v1303, %v1506
    %v1539 = vadd.f32 %v1306, %v1507
    %v1540 = vadd.f32 %v1308, %v1508
    %v1541 = vadd.f32 %v1311, %v1509
    %v1542 = vadd.f32 %v1313, %v1510
    %v1543 = vadd.f32 %v1316, %v1511
    %v1544 = vadd.f32 %v1318, %v1512
    %v1545 = vadd.f32 %v1321, %v1513
    %v1546 = vadd.f32 %v1323, %v1514
    %v1547 = vadd.f32 %v1326, %v1515
    %v1548 = vadd.f32 %v1328, %v1516
    %v1549 = vadd.f32 %v1331, %v1517
    %v1550 = vadd.f32 %v1333, %v1518
    %v1551 = vadd.f32 %v1336, %v1519
    %v1552 = vadd.f32 %v1338, %v1520
    %v1553 = vadd.f32 %v1341, %v1521
    %v1554 = vadd.f32 %v1343, %v1522
    %v1555 = vadd.f32 %v1346, %v1523
    %v1556 = vadd.f32 %v1348, %v1524
    %v1557 = vadd.f32 %v1351, %v1525
    %v1558 = vadd.f32 %v1353, %v1526
    %v1559 = vadd.f32 %v1356, %v1527
    %v1560 = vadd.f32 %v1358, %v1528
    %v1561 = vadd.f32 %v1361, %v1529
    %v1562 = vadd.f32 %v1363, %v1530
    %v1563 = vadd.f32 %v1366, %v1531
    %v1564 = vadd.f32 %v1368, %v1532
    %v1565 = vmul.f32 %v22, -0.5
    %v1566 = vmul.f32 %v23, -0.5
    %v1567 = vmul.f32 %v24, -0.5
    %v1568 = vmul.f32 %v25, -0.5
    %v1569 = vmul.f32 %v26, -0.5
    %v1570 = vmul.f32 %v27, -0.5
    %v1571 = vmul.f32 %v28, -0.5
    %v1572 = vmul.f32 %v29, -0.5
    %v1573 = vmul.f32 %v30, -0.5
    %v1574 = vmul.f32 %v31, -0.5
    %v1575 = vmul.f32 %v32, -0.5
    %v1576 = vmul.f32 %v33, -0.5
    %v1577 = vmul.f32 %v34, -0.5
    %v1578 = vmul.f32 %v35, -0.5
    %v1579 = vmul.f32 %v36, -0.5
    %v1580 = vmul.f32 %v37, -0.5
    %v1581 = vmul.f32 %v38, -0.5
    %v1582 = vmul.f32 %v39, -0.5
    %v1583 = vmul.f32 %v40, -0.5
    %v1584 = vmul.f32 %v41, -0.5
    %v1585 = vmul.f32 %v42, -0.5
    %v1586 = vmul.f32 %v43, -0.5
    %v1587 = vmul.f32 %v44, -0.5
    %v1588 = vmul.f32 %v45, -0.5
    %v1589 = vmul.f32 %v46, -0.5
    %v1590 = vmul.f32 %v47, -0.5
    %v1591 = vmul.f32 %v48, -0.5
    %v1592 = vmul.f32 %v49, -0.5
    %v1593 = vmul.f32 %v50, -0.5
    %v1594 = vmul.f32 %v51, -0.5
    %v1595 = vmul.f32 %v52, -0.5
    %v1596 = vmul.f32 %v53, -0.5
    %v1597 = vmul.f32 %v1565, %v22
    %v1598 = vmul.f32 %v1566, %v23
    %v1599 = vmul.f32 %v1567, %v24
    %v1600 = vmul.f32 %v1568, %v25
    %v1601 = vmul.f32 %v1569, %v26
    %v1602 = vmul.f32 %v1570, %v27
    %v1603 = vmul.f32 %v1571, %v28
    %v1604 = vmul.f32 %v1572, %v29
    %v1605 = vmul.f32 %v1573, %v30
    %v1606 = vmul.f32 %v1574, %v31
    %v1607 = vmul.f32 %v1575, %v32
    %v1608 = vmul.f32 %v1576, %v33
    %v1609 = vmul.f32 %v1577, %v34
    %v1610 = vmul.f32 %v1578, %v35
    %v1611 = vmul.f32 %v1579, %v36
    %v1612 = vmul.f32 %v1580, %v37
    %v1613 = vmul.f32 %v1581, %v38
    %v1614 = vmul.f32 %v1582, %v39
    %v1615 = vmul.f32 %v1583, %v40
    %v1616 = vmul.f32 %v1584, %v41
    %v1617 = vmul.f32 %v1585, %v42
    %v1618 = vmul.f32 %v1586, %v43
    %v1619 = vmul.f32 %v1587, %v44
    %v1620 = vmul.f32 %v1588, %v45
    %v1621 = vmul.f32 %v1589, %v46
    %v1622 = vmul.f32 %v1590, %v47
    %v1623 = vmul.f32 %v1591, %v48
    %v1624 = vmul.f32 %v1592, %v49
    %v1625 = vmul.f32 %v1593, %v50
    %v1626 = vmul.f32 %v1594, %v51
    %v1627 = vmul.f32 %v1595, %v52
    %v1628 = vmul.f32 %v1596, %v53
    %v1629 = vperm.slane %v70, 3
    %1631 = vrot.lane.b32.xlu0 %v1629, 16
    %v1632 = vpop.permute.xlu0 %1631
    %v1634 = vsub.f32 %v1597, %v1632
    %v1635 = vsub.f32 %v1598, %v1632
    %v1636 = vsub.f32 %v1599, %v1632
    %v1637 = vsub.f32 %v1600, %v1632
    %v1638 = vsub.f32 %v1601, %v1632
    %v1639 = vsub.f32 %v1602, %v1632
    %v1640 = vsub.f32 %v1603, %v1632
    %v1641 = vsub.f32 %v1604, %v1632
    %v1642 = vsub.f32 %v1605, %v1632
    %v1643 = vsub.f32 %v1606, %v1632
    %v1644 = vsub.f32 %v1607, %v1632
    %v1645 = vsub.f32 %v1608, %v1632
    %v1646 = vsub.f32 %v1609, %v1632
    %v1647 = vsub.f32 %v1610, %v1632
    %v1648 = vsub.f32 %v1611, %v1632
    %v1649 = vsub.f32 %v1612, %v1632
    %v1650 = vsub.f32 %v1613, %v1632
    %v1651 = vsub.f32 %v1614, %v1632
    %v1652 = vsub.f32 %v1615, %v1632
    %v1653 = vsub.f32 %v1616, %v1632
    %v1654 = vsub.f32 %v1617, %v1632
    %v1655 = vsub.f32 %v1618, %v1632
    %v1656 = vsub.f32 %v1619, %v1632
    %v1657 = vsub.f32 %v1620, %v1632
    %v1658 = vsub.f32 %v1621, %v1632
    %v1659 = vsub.f32 %v1622, %v1632
    %v1660 = vsub.f32 %v1623, %v1632
    %v1661 = vsub.f32 %v1624, %v1632
    %v1662 = vsub.f32 %v1625, %v1632
    %v1663 = vsub.f32 %v1626, %v1632
    %v1664 = vsub.f32 %v1627, %v1632
    %v1665 = vsub.f32 %v1628, %v1632
    %v1666 = vsub.f32 %v1634, 0.9189385
    %v1667 = vsub.f32 %v1635, 0.9189385
    %v1668 = vsub.f32 %v1636, 0.9189385
    %v1669 = vsub.f32 %v1637, 0.9189385
    %v1670 = vsub.f32 %v1638, 0.9189385
    %v1671 = vsub.f32 %v1639, 0.9189385
    %v1672 = vsub.f32 %v1640, 0.9189385
    %v1673 = vsub.f32 %v1641, 0.9189385
    %v1674 = vsub.f32 %v1642, 0.9189385
    %v1675 = vsub.f32 %v1643, 0.9189385
    %v1676 = vsub.f32 %v1644, 0.9189385
    %v1677 = vsub.f32 %v1645, 0.9189385
    %v1678 = vsub.f32 %v1646, 0.9189385
    %v1679 = vsub.f32 %v1647, 0.9189385
    %v1680 = vsub.f32 %v1648, 0.9189385
    %v1681 = vsub.f32 %v1649, 0.9189385
    %v1682 = vsub.f32 %v1650, 0.9189385
    %v1683 = vsub.f32 %v1651, 0.9189385
    %v1684 = vsub.f32 %v1652, 0.9189385
    %v1685 = vsub.f32 %v1653, 0.9189385
    %v1686 = vsub.f32 %v1654, 0.9189385
    %v1687 = vsub.f32 %v1655, 0.9189385
    %v1688 = vsub.f32 %v1656, 0.9189385
    %v1689 = vsub.f32 %v1657, 0.9189385
    %v1690 = vsub.f32 %v1658, 0.9189385
    %v1691 = vsub.f32 %v1659, 0.9189385
    %v1692 = vsub.f32 %v1660, 0.9189385
    %v1693 = vsub.f32 %v1661, 0.9189385
    %v1694 = vsub.f32 %v1662, 0.9189385
    %v1695 = vsub.f32 %v1663, 0.9189385
    %v1696 = vsub.f32 %v1664, 0.9189385
    %v1697 = vsub.f32 %v1665, 0.9189385
    %1730 = vrot.lane.b32.xlu0 %v1666, 112
    %v1731 = vpop.permute.xlu0 %1730
    %1732 = vrot.lane.b32.xlu0 %v1667, 112
    %v1733 = vpop.permute.xlu0 %1732
    %1734 = vrot.lane.b32.xlu0 %v1668, 112
    %v1735 = vpop.permute.xlu0 %1734
    %1736 = vrot.lane.b32.xlu0 %v1669, 112
    %v1737 = vpop.permute.xlu0 %1736
    %1738 = vrot.lane.b32.xlu0 %v1670, 112
    %v1739 = vpop.permute.xlu0 %1738
    %1740 = vrot.lane.b32.xlu0 %v1671, 112
    %v1741 = vpop.permute.xlu0 %1740
    %1742 = vrot.lane.b32.xlu0 %v1672, 112
    %v1743 = vpop.permute.xlu0 %1742
    %1744 = vrot.lane.b32.xlu0 %v1673, 112
    %v1745 = vpop.permute.xlu0 %1744
    %1746 = vrot.lane.b32.xlu0 %v1674, 112
    %v1747 = vpop.permute.xlu0 %1746
    %1748 = vrot.lane.b32.xlu0 %v1675, 112
    %v1749 = vpop.permute.xlu0 %1748
    %1750 = vrot.lane.b32.xlu0 %v1676, 112
    %v1751 = vpop.permute.xlu0 %1750
    %1752 = vrot.lane.b32.xlu0 %v1677, 112
    %v1753 = vpop.permute.xlu0 %1752
    %1754 = vrot.lane.b32.xlu0 %v1678, 112
    %v1755 = vpop.permute.xlu0 %1754
    %1756 = vrot.lane.b32.xlu0 %v1679, 112
    %v1757 = vpop.permute.xlu0 %1756
    %1758 = vrot.lane.b32.xlu0 %v1680, 112
    %v1759 = vpop.permute.xlu0 %1758
    %1760 = vrot.lane.b32.xlu0 %v1681, 112
    %v1761 = vpop.permute.xlu0 %1760
    %1762 = vrot.lane.b32.xlu0 %v1682, 112
    %v1763 = vpop.permute.xlu0 %1762
    %1764 = vrot.lane.b32.xlu0 %v1683, 112
    %v1765 = vpop.permute.xlu0 %1764
    %1766 = vrot.lane.b32.xlu0 %v1684, 112
    %v1767 = vpop.permute.xlu0 %1766
    %1768 = vrot.lane.b32.xlu0 %v1685, 112
    %v1769 = vpop.permute.xlu0 %1768
    %1770 = vrot.lane.b32.xlu0 %v1686, 112
    %v1771 = vpop.permute.xlu0 %1770
    %1772 = vrot.lane.b32.xlu0 %v1687, 112
    %v1773 = vpop.permute.xlu0 %1772
    %1774 = vrot.lane.b32.xlu0 %v1688, 112
    %v1775 = vpop.permute.xlu0 %1774
    %1776 = vrot.lane.b32.xlu0 %v1689, 112
    %v1777 = vpop.permute.xlu0 %1776
    %1778 = vrot.lane.b32.xlu0 %v1690, 112
    %v1779 = vpop.permute.xlu0 %1778
    %1780 = vrot.lane.b32.xlu0 %v1691, 112
    %v1781 = vpop.permute.xlu0 %1780
    %1782 = vrot.lane.b32.xlu0 %v1692, 112
    %v1783 = vpop.permute.xlu0 %1782
    %1784 = vrot.lane.b32.xlu0 %v1693, 112
    %v1785 = vpop.permute.xlu0 %1784
    %1786 = vrot.lane.b32.xlu0 %v1694, 112
    %v1787 = vpop.permute.xlu0 %1786
    %1788 = vrot.lane.b32.xlu0 %v1695, 112
    %v1789 = vpop.permute.xlu0 %1788
    %1790 = vrot.lane.b32.xlu0 %v1696, 112
    %v1791 = vpop.permute.xlu0 %1790
    %1792 = vrot.lane.b32.xlu0 %v1697, 112
    %v1793 = vpop.permute.xlu0 %1792
    %vm1826 = vcmask 31744
    %v1827 = vsel %vm1826, %v1731, 0.0
    %1828 = vadd.xlane.f32.xlu0 %v1827
    %v1829 = vpop.xlane.xlu0 %1828
    %v1830 = vsel %vm1826, %v1733, 0.0
    %1831 = vadd.xlane.f32.xlu0 %v1830
    %v1832 = vpop.xlane.xlu0 %1831
    %v1833 = vsel %vm1826, %v1735, 0.0
    %1834 = vadd.xlane.f32.xlu0 %v1833
    %v1835 = vpop.xlane.xlu0 %1834
    %v1836 = vsel %vm1826, %v1737, 0.0
    %1837 = vadd.xlane.f32.xlu0 %v1836
    %v1838 = vpop.xlane.xlu0 %1837
    %v1839 = vsel %vm1826, %v1739, 0.0
    %1840 = vadd.xlane.f32.xlu0 %v1839
    %v1841 = vpop.xlane.xlu0 %1840
    %v1842 = vsel %vm1826, %v1741, 0.0
    %1843 = vadd.xlane.f32.xlu0 %v1842
    %v1844 = vpop.xlane.xlu0 %1843
    %v1845 = vsel %vm1826, %v1743, 0.0
    %1846 = vadd.xlane.f32.xlu0 %v1845
    %v1847 = vpop.xlane.xlu0 %1846
    %v1848 = vsel %vm1826, %v1745, 0.0
    %1849 = vadd.xlane.f32.xlu0 %v1848
    %v1850 = vpop.xlane.xlu0 %1849
    %v1851 = vsel %vm1826, %v1747, 0.0
    %1852 = vadd.xlane.f32.xlu0 %v1851
    %v1853 = vpop.xlane.xlu0 %1852
    %v1854 = vsel %vm1826, %v1749, 0.0
    %1855 = vadd.xlane.f32.xlu0 %v1854
    %v1856 = vpop.xlane.xlu0 %1855
    %v1857 = vsel %vm1826, %v1751, 0.0
    %1858 = vadd.xlane.f32.xlu0 %v1857
    %v1859 = vpop.xlane.xlu0 %1858
    %v1860 = vsel %vm1826, %v1753, 0.0
    %1861 = vadd.xlane.f32.xlu0 %v1860
    %v1862 = vpop.xlane.xlu0 %1861
    %v1863 = vsel %vm1826, %v1755, 0.0
    %1864 = vadd.xlane.f32.xlu0 %v1863
    %v1865 = vpop.xlane.xlu0 %1864
    %v1866 = vsel %vm1826, %v1757, 0.0
    %1867 = vadd.xlane.f32.xlu0 %v1866
    %v1868 = vpop.xlane.xlu0 %1867
    %v1869 = vsel %vm1826, %v1759, 0.0
    %1870 = vadd.xlane.f32.xlu0 %v1869
    %v1871 = vpop.xlane.xlu0 %1870
    %v1872 = vsel %vm1826, %v1761, 0.0
    %1873 = vadd.xlane.f32.xlu0 %v1872
    %v1874 = vpop.xlane.xlu0 %1873
    %v1875 = vsel %vm1826, %v1763, 0.0
    %1876 = vadd.xlane.f32.xlu0 %v1875
    %v1877 = vpop.xlane.xlu0 %1876
    %v1878 = vsel %vm1826, %v1765, 0.0
    %1879 = vadd.xlane.f32.xlu0 %v1878
    %v1880 = vpop.xlane.xlu0 %1879
    %v1881 = vsel %vm1826, %v1767, 0.0
    %1882 = vadd.xlane.f32.xlu0 %v1881
    %v1883 = vpop.xlane.xlu0 %1882
    %v1884 = vsel %vm1826, %v1769, 0.0
    %1885 = vadd.xlane.f32.xlu0 %v1884
    %v1886 = vpop.xlane.xlu0 %1885
    %v1887 = vsel %vm1826, %v1771, 0.0
    %1888 = vadd.xlane.f32.xlu0 %v1887
    %v1889 = vpop.xlane.xlu0 %1888
    %v1890 = vsel %vm1826, %v1773, 0.0
    %1891 = vadd.xlane.f32.xlu0 %v1890
    %v1892 = vpop.xlane.xlu0 %1891
    %v1893 = vsel %vm1826, %v1775, 0.0
    %1894 = vadd.xlane.f32.xlu0 %v1893
    %v1895 = vpop.xlane.xlu0 %1894
    %v1896 = vsel %vm1826, %v1777, 0.0
    %1897 = vadd.xlane.f32.xlu0 %v1896
    %v1898 = vpop.xlane.xlu0 %1897
    %v1899 = vsel %vm1826, %v1779, 0.0
    %1900 = vadd.xlane.f32.xlu0 %v1899
    %v1901 = vpop.xlane.xlu0 %1900
    %v1902 = vsel %vm1826, %v1781, 0.0
    %1903 = vadd.xlane.f32.xlu0 %v1902
    %v1904 = vpop.xlane.xlu0 %1903
    %v1905 = vsel %vm1826, %v1783, 0.0
    %1906 = vadd.xlane.f32.xlu0 %v1905
    %v1907 = vpop.xlane.xlu0 %1906
    %v1908 = vsel %vm1826, %v1785, 0.0
    %1909 = vadd.xlane.f32.xlu0 %v1908
    %v1910 = vpop.xlane.xlu0 %1909
    %v1911 = vsel %vm1826, %v1787, 0.0
    %1912 = vadd.xlane.f32.xlu0 %v1911
    %v1913 = vpop.xlane.xlu0 %1912
    %v1914 = vsel %vm1826, %v1789, 0.0
    %1915 = vadd.xlane.f32.xlu0 %v1914
    %v1916 = vpop.xlane.xlu0 %1915
    %v1917 = vsel %vm1826, %v1791, 0.0
    %1918 = vadd.xlane.f32.xlu0 %v1917
    %v1919 = vpop.xlane.xlu0 %1918
    %v1920 = vsel %vm1826, %v1793, 0.0
    %1921 = vadd.xlane.f32.xlu0 %v1920
    %v1922 = vpop.xlane.xlu0 %1921
    %1955 = vrot.lane.b32.xlu0 %v1291, 1
    %v1956 = vpop.permute.xlu0 %1955
    %1957 = vrot.lane.b32.xlu0 %v1293, 1
    %v1958 = vpop.permute.xlu0 %1957
    %1959 = vrot.lane.b32.xlu0 %v1296, 1
    %v1960 = vpop.permute.xlu0 %1959
    %1961 = vrot.lane.b32.xlu0 %v1298, 1
    %v1962 = vpop.permute.xlu0 %1961
    %1963 = vrot.lane.b32.xlu0 %v1301, 1
    %v1964 = vpop.permute.xlu0 %1963
    %1965 = vrot.lane.b32.xlu0 %v1303, 1
    %v1966 = vpop.permute.xlu0 %1965
    %1967 = vrot.lane.b32.xlu0 %v1306, 1
    %v1968 = vpop.permute.xlu0 %1967
    %1969 = vrot.lane.b32.xlu0 %v1308, 1
    %v1970 = vpop.permute.xlu0 %1969
    %1971 = vrot.lane.b32.xlu0 %v1311, 1
    %v1972 = vpop.permute.xlu0 %1971
    %1973 = vrot.lane.b32.xlu0 %v1313, 1
    %v1974 = vpop.permute.xlu0 %1973
    %1975 = vrot.lane.b32.xlu0 %v1316, 1
    %v1976 = vpop.permute.xlu0 %1975
    %1977 = vrot.lane.b32.xlu0 %v1318, 1
    %v1978 = vpop.permute.xlu0 %1977
    %1979 = vrot.lane.b32.xlu0 %v1321, 1
    %v1980 = vpop.permute.xlu0 %1979
    %1981 = vrot.lane.b32.xlu0 %v1323, 1
    %v1982 = vpop.permute.xlu0 %1981
    %1983 = vrot.lane.b32.xlu0 %v1326, 1
    %v1984 = vpop.permute.xlu0 %1983
    %1985 = vrot.lane.b32.xlu0 %v1328, 1
    %v1986 = vpop.permute.xlu0 %1985
    %1987 = vrot.lane.b32.xlu0 %v1331, 1
    %v1988 = vpop.permute.xlu0 %1987
    %1989 = vrot.lane.b32.xlu0 %v1333, 1
    %v1990 = vpop.permute.xlu0 %1989
    %1991 = vrot.lane.b32.xlu0 %v1336, 1
    %v1992 = vpop.permute.xlu0 %1991
    %1993 = vrot.lane.b32.xlu0 %v1338, 1
    %v1994 = vpop.permute.xlu0 %1993
    %1995 = vrot.lane.b32.xlu0 %v1341, 1
    %v1996 = vpop.permute.xlu0 %1995
    %1997 = vrot.lane.b32.xlu0 %v1343, 1
    %v1998 = vpop.permute.xlu0 %1997
    %1999 = vrot.lane.b32.xlu0 %v1346, 1
    %v2000 = vpop.permute.xlu0 %1999
    %2001 = vrot.lane.b32.xlu0 %v1348, 1
    %v2002 = vpop.permute.xlu0 %2001
    %2003 = vrot.lane.b32.xlu0 %v1351, 1
    %v2004 = vpop.permute.xlu0 %2003
    %2005 = vrot.lane.b32.xlu0 %v1353, 1
    %v2006 = vpop.permute.xlu0 %2005
    %2007 = vrot.lane.b32.xlu0 %v1356, 1
    %v2008 = vpop.permute.xlu0 %2007
    %2009 = vrot.lane.b32.xlu0 %v1358, 1
    %v2010 = vpop.permute.xlu0 %2009
    %2011 = vrot.lane.b32.xlu0 %v1361, 1
    %v2012 = vpop.permute.xlu0 %2011
    %2013 = vrot.lane.b32.xlu0 %v1363, 1
    %v2014 = vpop.permute.xlu0 %2013
    %2015 = vrot.lane.b32.xlu0 %v1366, 1
    %v2016 = vpop.permute.xlu0 %2015
    %2017 = vrot.lane.b32.xlu0 %v1368, 1
    %v2018 = vpop.permute.xlu0 %2017
    %v2051 = vsel %vm1826, %v1533, %v1829
    %v2052 = vsel %vm1826, %v1534, %v1832
    %v2053 = vsel %vm1826, %v1535, %v1835
    %v2054 = vsel %vm1826, %v1536, %v1838
    %v2055 = vsel %vm1826, %v1537, %v1841
    %v2056 = vsel %vm1826, %v1538, %v1844
    %v2057 = vsel %vm1826, %v1539, %v1847
    %v2058 = vsel %vm1826, %v1540, %v1850
    %v2059 = vsel %vm1826, %v1541, %v1853
    %v2060 = vsel %vm1826, %v1542, %v1856
    %v2061 = vsel %vm1826, %v1543, %v1859
    %v2062 = vsel %vm1826, %v1544, %v1862
    %v2063 = vsel %vm1826, %v1545, %v1865
    %v2064 = vsel %vm1826, %v1546, %v1868
    %v2065 = vsel %vm1826, %v1547, %v1871
    %v2066 = vsel %vm1826, %v1548, %v1874
    %v2067 = vsel %vm1826, %v1549, %v1877
    %v2068 = vsel %vm1826, %v1550, %v1880
    %v2069 = vsel %vm1826, %v1551, %v1883
    %v2070 = vsel %vm1826, %v1552, %v1886
    %v2071 = vsel %vm1826, %v1553, %v1889
    %v2072 = vsel %vm1826, %v1554, %v1892
    %v2073 = vsel %vm1826, %v1555, %v1895
    %v2074 = vsel %vm1826, %v1556, %v1898
    %v2075 = vsel %vm1826, %v1557, %v1901
    %v2076 = vsel %vm1826, %v1558, %v1904
    %v2077 = vsel %vm1826, %v1559, %v1907
    %v2078 = vsel %vm1826, %v1560, %v1910
    %v2079 = vsel %vm1826, %v1561, %v1913
    %v2080 = vsel %vm1826, %v1562, %v1916
    %v2081 = vsel %vm1826, %v1563, %v1919
    %v2082 = vsel %vm1826, %v1564, %v1922
    %vm2083 = vcmask 39936
    %v2084 = vsel %vm2083, %v2051, %v1956
    %v2085 = vsel %vm2083, %v2052, %v1958
    %v2086 = vsel %vm2083, %v2053, %v1960
    %v2087 = vsel %vm2083, %v2054, %v1962
    %v2088 = vsel %vm2083, %v2055, %v1964
    %v2089 = vsel %vm2083, %v2056, %v1966
    %v2090 = vsel %vm2083, %v2057, %v1968
    %v2091 = vsel %vm2083, %v2058, %v1970
    %v2092 = vsel %vm2083, %v2059, %v1972
    %v2093 = vsel %vm2083, %v2060, %v1974
    %v2094 = vsel %vm2083, %v2061, %v1976
    %v2095 = vsel %vm2083, %v2062, %v1978
    %v2096 = vsel %vm2083, %v2063, %v1980
    %v2097 = vsel %vm2083, %v2064, %v1982
    %v2098 = vsel %vm2083, %v2065, %v1984
    %v2099 = vsel %vm2083, %v2066, %v1986
    %v2100 = vsel %vm2083, %v2067, %v1988
    %v2101 = vsel %vm2083, %v2068, %v1990
    %v2102 = vsel %vm2083, %v2069, %v1992
    %v2103 = vsel %vm2083, %v2070, %v1994
    %v2104 = vsel %vm2083, %v2071, %v1996
    %v2105 = vsel %vm2083, %v2072, %v1998
    %v2106 = vsel %vm2083, %v2073, %v2000
    %v2107 = vsel %vm2083, %v2074, %v2002
    %v2108 = vsel %vm2083, %v2075, %v2004
    %v2109 = vsel %vm2083, %v2076, %v2006
    %v2110 = vsel %vm2083, %v2077, %v2008
    %v2111 = vsel %vm2083, %v2078, %v2010
    %v2112 = vsel %vm2083, %v2079, %v2012
    %v2113 = vsel %vm2083, %v2080, %v2014
    %v2114 = vsel %vm2083, %v2081, %v2016
    %v2115 = vsel %vm2083, %v2082, %v2018
    %vm2116 = vcmask 48128
    %v2117 = vsel %vm2116, %v2084, 0.0
    %v2118 = vsel %vm2116, %v2085, 0.0
    %v2119 = vsel %vm2116, %v2086, 0.0
    %v2120 = vsel %vm2116, %v2087, 0.0
    %v2121 = vsel %vm2116, %v2088, 0.0
    %v2122 = vsel %vm2116, %v2089, 0.0
    %v2123 = vsel %vm2116, %v2090, 0.0
    %v2124 = vsel %vm2116, %v2091, 0.0
    %v2125 = vsel %vm2116, %v2092, 0.0
    %v2126 = vsel %vm2116, %v2093, 0.0
    %v2127 = vsel %vm2116, %v2094, 0.0
    %v2128 = vsel %vm2116, %v2095, 0.0
    %v2129 = vsel %vm2116, %v2096, 0.0
    %v2130 = vsel %vm2116, %v2097, 0.0
    %v2131 = vsel %vm2116, %v2098, 0.0
    %v2132 = vsel %vm2116, %v2099, 0.0
    %v2133 = vsel %vm2116, %v2100, 0.0
    %v2134 = vsel %vm2116, %v2101, 0.0
    %v2135 = vsel %vm2116, %v2102, 0.0
    %v2136 = vsel %vm2116, %v2103, 0.0
    %v2137 = vsel %vm2116, %v2104, 0.0
    %v2138 = vsel %vm2116, %v2105, 0.0
    %v2139 = vsel %vm2116, %v2106, 0.0
    %v2140 = vsel %vm2116, %v2107, 0.0
    %v2141 = vsel %vm2116, %v2108, 0.0
    %v2142 = vsel %vm2116, %v2109, 0.0
    %v2143 = vsel %vm2116, %v2110, 0.0
    %v2144 = vsel %vm2116, %v2111, 0.0
    %v2145 = vsel %vm2116, %v2112, 0.0
    %v2146 = vsel %vm2116, %v2113, 0.0
    %v2147 = vsel %vm2116, %v2114, 0.0
    %v2148 = vsel %vm2116, %v2115, 0.0
    %2149 = vst [vmem:[#allocation2] sm:$0xff] %v2117
    %2150 = vst [vmem:[#allocation2 + $0x8] sm:$0xff] %v2118
    %2151 = vst [vmem:[#allocation2 + $0x10] sm:$0xff] %v2119
    %2152 = vst [vmem:[#allocation2 + $0x18] sm:$0xff] %v2120
    %2153 = vst [vmem:[#allocation2 + $0x20] sm:$0xff] %v2121
    %2154 = vst [vmem:[#allocation2 + $0x28] sm:$0xff] %v2122
    %2155 = vst [vmem:[#allocation2 + $0x30] sm:$0xff] %v2123
    %2156 = vst [vmem:[#allocation2 + $0x38] sm:$0xff] %v2124
    %2157 = vst [vmem:[#allocation2 + $0x40] sm:$0xff] %v2125
    %2158 = vst [vmem:[#allocation2 + $0x48] sm:$0xff] %v2126
    %2159 = vst [vmem:[#allocation2 + $0x50] sm:$0xff] %v2127
    %2160 = vst [vmem:[#allocation2 + $0x58] sm:$0xff] %v2128
    %2161 = vst [vmem:[#allocation2 + $0x60] sm:$0xff] %v2129
    %2162 = vst [vmem:[#allocation2 + $0x68] sm:$0xff] %v2130
    %2163 = vst [vmem:[#allocation2 + $0x70] sm:$0xff] %v2131
    %2164 = vst [vmem:[#allocation2 + $0x78] sm:$0xff] %v2132
    %2165 = vst [vmem:[#allocation2 + $0x80] sm:$0xff] %v2133
    %2166 = vst [vmem:[#allocation2 + $0x88] sm:$0xff] %v2134
    %2167 = vst [vmem:[#allocation2 + $0x90] sm:$0xff] %v2135
    %2168 = vst [vmem:[#allocation2 + $0x98] sm:$0xff] %v2136
    %2169 = vst [vmem:[#allocation2 + $0xa0] sm:$0xff] %v2137
    %2170 = vst [vmem:[#allocation2 + $0xa8] sm:$0xff] %v2138
    %2171 = vst [vmem:[#allocation2 + $0xb0] sm:$0xff] %v2139
    %2172 = vst [vmem:[#allocation2 + $0xb8] sm:$0xff] %v2140
    %2173 = vst [vmem:[#allocation2 + $0xc0] sm:$0xff] %v2141
    %2174 = vst [vmem:[#allocation2 + $0xc8] sm:$0xff] %v2142
    %2175 = vst [vmem:[#allocation2 + $0xd0] sm:$0xff] %v2143
    %2176 = vst [vmem:[#allocation2 + $0xd8] sm:$0xff] %v2144
    %2177 = vst [vmem:[#allocation2 + $0xe0] sm:$0xff] %v2145
    %2178 = vst [vmem:[#allocation2 + $0xe8] sm:$0xff] %v2146
    %2179 = vst [vmem:[#allocation2 + $0xf0] sm:$0xff] %v2147
    %2180 = vst [vmem:[#allocation2 + $0xf8] sm:$0xff] %v2148
    // Predicated region
    $region22: #{tpu_custom_call.1} parent=1 // pred_check
      _
    $region23: #{tpu_custom_call.1} parent=1 // pred_check_branch
      %2182 = sbr.rel (0) target = $region25
    $region24: #{tpu_custom_call.1} parent=1 // pred_region
      %2184 = vsyncadd [#allocation3], 0
      %s2185 = sshll.u32 [#allocation2], 4
      %s2186 = int_to_ptr.vmem [resolvable:$true] %s2185
      %s2187 = sshll.u32 %s5, 4
      %s2188 = int_to_ptr.hbm [resolvable:$true] %s2187
      %2193 = dma.vmem_to_hbm [thread:$0]  %s2186, 4096, %s2188, [#allocation3], 128, 128, 8
    $region25: #{tpu_custom_call.1} parent=1 // pred_fallthru
      _
    // Predicated region
    $region26: #{tpu_custom_call.1} parent=1 // pred_check
      _
    $region27: #{tpu_custom_call.1} parent=1 // pred_check_branch
      %2195 = sbr.rel (0) target = $region29
    $region28: #{tpu_custom_call.1} parent=1 // pred_region
      %2197 = dma.done [#allocation3], 4096
    $region29: #{tpu_custom_call.1} parent=1 // pred_fallthru
      _
    %2198 = vsyncpa [#allocation3], 1

</llo_original>
